<compile_context>
chip_gen: v5e
topology: v5e:2x2
jax: 0.10.0
libtpu: 0.0.40
codegen_flags: <defaults>
</compile_context>

<pallas_src>
import math
import functools

import numpy as np
import jax
import jax.numpy as jnp
from jax.experimental import pallas as pl
from jax.experimental.pallas import tpu as pltpu


# --------------------------------------------------------------------------- #
# Kernel
# --------------------------------------------------------------------------- #
def _self_attention_kernel(x_ref, w3_ref, b3_ref, wd_ref, bd_ref,
                           kmask_ref, vmask_ref,
                           out_ref, probs_ref,
                           qkv_ref,
                           *, matmul_dtype):
    Bt, S, H = x_ref.shape

    # Flatten the batch block into the sublane axis for the projection matmuls.
    x2d = x_ref[...].reshape(Bt * S, H).astype(matmul_dtype)          # (Bt*S, H)

    # ---- Q/K/V projections -------------------------------------------------
    # Stacked (3, H, H) weight + (3, Bt*S, H) scratch: every access below is a
    # full-tile, lane-aligned read/write for any H.  Bias add in f32, one cast
    # on the store; scratch stays in matmul_dtype (half the f32 VMEM/traffic).
    # The 1/sqrt(head_size) scale is already folded into wq/bq at prep time.
    for i in range(3):
        qkv_ref[i] = (jnp.dot(x2d, w3_ref[i],
                              preferred_element_type=jnp.float32)
                      + b3_ref[i]).astype(matmul_dtype)

    q = qkv_ref[0].reshape(Bt, S, H)     # matmul_dtype, scale folded in
    k = qkv_ref[1].reshape(Bt, S, H)
    v = qkv_ref[2].reshape(Bt, S, H)

    # ---- Attention scores: Q @ K^T (+ additive key mask) -------------------
    # Contracting-on-last-dim einsum -> batched dot_general, no explicit K^T.
    scores = jnp.einsum('bqd,bkd->bqk', q, k,
                        preferred_element_type=jnp.float32)          # (Bt,S,S) f32
    # kmask_ref is (Bt, 1, S): the module's (S, S) additive mask is rebuilt by
    # broadcasting the per-key bias over the query axis (O(B*S) HBM traffic).
    scores = scores + kmask_ref[...]
    # TODO(synk): presci_adj_matrix would need a streamed (block_b,S,S) input.

    # ---- Numerically stable softmax (all f32 on VPU/EUP) -------------------
    m = jnp.max(scores, axis=-1, keepdims=True)
    e = jnp.exp(scores - m)
    denom = jnp.sum(e, axis=-1, keepdims=True)

    # Exact reciprocal for the probs returned to the caller (rows sum to 1 up
    # to the output dtype); EUP approximate reciprocal on the ctx path.
    probs_ref[...] = (e * pl.reciprocal(denom)).astype(probs_ref.dtype)
    probs_mm = (e * pl.reciprocal(denom, approx=True)).astype(matmul_dtype)

    # attn_dropout(p=0) -> identity.
    ctx = jnp.einsum('bqk,bkd->bqd', probs_mm, v,
                     preferred_element_type=jnp.float32)             # (Bt,S,H) f32

    # ---- Output dense projection -------------------------------------------
    hidden = (jnp.dot(ctx.reshape(Bt * S, H).astype(matmul_dtype), wd_ref[...],
                      preferred_element_type=jnp.float32)
              + bd_ref[...])                                         # (Bt*S, H) f32

    # out_dropout(p=0) -> identity; multiply by value_attention_mask.
    hidden = hidden.reshape(Bt, S, H) * vmask_ref[...]               # (Bt,S,1) bcast
    # LayerNorm is None in this configuration -> no residual + LN.
    out_ref[...] = hidden.astype(out_ref.dtype)


# --------------------------------------------------------------------------- #
# Weight prep (call ONCE, not per forward)
# --------------------------------------------------------------------------- #
def prepare_params(params, hidden_size, n_heads=1, matmul_dtype=jnp.bfloat16):
    """Stack / scale / cast the SelfAttention weights once.

    Returns (w3, b3, wd, bd):
      w3: (3, H, H) matmul_dtype  — [wq*scale, wk, wv], weights stored (in, out)
      b3: (3, 1, H) f32           — [bq*scale, bk, bv]
      wd: (H, H)   matmul_dtype
      bd: (1, H)   f32
    """
    wq, bq, wk, bk, wv, bv, wd, bd = params
    head_size = hidden_size // n_heads
    scale = 1.0 / math.sqrt(head_size)
    w3 = jnp.stack([wq * scale, wk, wv]).astype(matmul_dtype)
    b3 = jnp.stack([jnp.reshape(bq, (1, hidden_size)) * scale,
                    jnp.reshape(bk, (1, hidden_size)),
                    jnp.reshape(bv, (1, hidden_size))]).astype(jnp.float32)
    wd_p = wd.astype(matmul_dtype)
    bd_p = jnp.reshape(bd, (1, hidden_size)).astype(jnp.float32)
    # TODO(synk): optional fp8 weight path on v7x (bf16 activations, f32 accum).
    return w3, b3, wd_p, bd_p


# --------------------------------------------------------------------------- #
# Tiling helpers
# --------------------------------------------------------------------------- #
def _vmem_capacity_bytes():
    try:
        return int(pltpu.get_tpu_info().vmem_capacity_bytes)
    except Exception:
        return 64 * 2**20          # conservative v7x floor


def _itemsize(dt):
    return np.dtype(dt).itemsize


def _choose_block_b(B, S, H, mm_bytes, probs_bytes, budget_bytes, target_steps=8):
    """Largest batch block that (a) fits the per-step VMEM budget and (b) still
    leaves >= target_steps grid steps (>= 4 per v7x TensorCore) so the software
    pipeline overlaps prefetch/writeback with compute."""
    def per_step(bb):
        io = 2 * (bb * S * H * 4                 # x block (double-buffered)
                  + bb * S * H * 4               # hidden_states block
                  + bb * S * S * probs_bytes     # probs block
                  + bb * S * 4 + bb * S * 4)     # key mask + value mask blocks
        weights = (3 * H * H + H * H) * mm_bytes + 4 * H * 4   # single-buffered
        scratch = 3 * bb * S * H * mm_bytes
        return io + weights + scratch

    divisors = [d for d in range(1, B + 1) if B % d == 0]
    fitting = [d for d in divisors if per_step(d) <= budget_bytes]
    if not fitting:
        return 1
    pipelined = [d for d in fitting if B // d >= min(target_steps, B)]
    return max(pipelined) if pipelined else min(fitting)


# --------------------------------------------------------------------------- #
# Wrapper
# --------------------------------------------------------------------------- #
def self_attention(x, prepared_params, key_attention_mask, value_attention_mask,
                   *, block_b=None, probs_dtype=jnp.bfloat16):
    """SelfAttention forward.

    x:                    (B, S, H) f32
    prepared_params:      output of prepare_params()
    key_attention_mask:   (B, S) additive per-key bias (0 / -1e9 padding mask);
                          the module's (B, S, S) additive mask is rebuilt
                          in-kernel by broadcasting over the query axis.
    value_attention_mask: (B, S, 1) multiplicative mask on the output.
    probs_dtype:          dtype of the returned attention_probs (default bf16).
    """
    B, S, H = x.shape
    w3, b3, wd, bd = prepared_params
    matmul_dtype = w3.dtype

    kmask = jnp.reshape(key_attention_mask, (B, 1, S)).astype(jnp.float32)
    vmask = jnp.reshape(value_attention_mask, (B, S, 1)).astype(jnp.float32)

    vmem_cap = _vmem_capacity_bytes()
    if block_b is None:
        block_b = _choose_block_b(B, S, H,
                                  _itemsize(matmul_dtype), _itemsize(probs_dtype),
                                  budget_bytes=int(0.7 * vmem_cap))
    assert B % block_b == 0, "batch size must be divisible by block_b"
    grid = (B // block_b,)

    kernel = functools.partial(_self_attention_kernel, matmul_dtype=matmul_dtype)

    def build(single_buffer_weights):
        if single_buffer_weights:
            # Grid-invariant weights: no need to double-buffer a block whose
            # index_map is constant -> free the duplicate weight VMEM.
            def wspec(shape):
                return pl.BlockSpec(shape, lambda *_: (0,) * len(shape),
                                    pipeline_mode=pl.Buffered(1))
        else:
            def wspec(shape):
                return pl.BlockSpec(shape, lambda *_: (0,) * len(shape))

        return pl.pallas_call(
            kernel,
            out_shape=(
                jax.ShapeDtypeStruct((B, S, H), jnp.float32),
                jax.ShapeDtypeStruct((B, S, S), probs_dtype),
            ),
            grid_spec=pltpu.PrefetchScalarGridSpec(
                num_scalar_prefetch=0,
                grid=grid,
                in_specs=[
                    pl.BlockSpec((block_b, S, H), lambda b: (b, 0, 0)),   # x
                    wspec((3, H, H)),                                     # stacked W_q/k/v
                    wspec((3, 1, H)),                                     # stacked biases
                    wspec((H, H)),                                        # W_dense
                    wspec((1, H)),                                        # b_dense
                    pl.BlockSpec((block_b, 1, S), lambda b: (b, 0, 0)),   # additive key mask
                    # TODO(synk): lane-width-1 masked load; make lane-dense only
                    # if vector loads ever become the binding slot.
                    pl.BlockSpec((block_b, S, 1), lambda b: (b, 0, 0)),   # value mask
                ],
                out_specs=[
                    pl.BlockSpec((block_b, S, H), lambda b: (b, 0, 0)),   # hidden_states
                    pl.BlockSpec((block_b, S, S), lambda b: (b, 0, 0)),   # attention_probs
                ],
                scratch_shapes=[pltpu.VMEM((3, block_b * S, H), matmul_dtype)],
            ),
            compiler_params=pltpu.CompilerParams(
                dimension_semantics=("parallel",),
                vmem_limit_bytes=int(min(0.9 * vmem_cap, 128 * 2**20)),
            ),
        )

    args = (x, w3, b3, wd, bd, kmask, vmask)
    try:
        hidden_states, attention_probs = build(True)(*args)
    except Exception:
        # Fallback if single-buffered inputs (pl.Buffered(1)) are not supported
        # by this jax version's Mosaic lowering.
        hidden_states, attention_probs = build(False)(*args)
    return hidden_states, attention_probs


# --------------------------------------------------------------------------- #
# Pure-JAX reference + init (mirrors the PyTorch forward)
# --------------------------------------------------------------------------- #
def _reference(x, params, attention_mask, value_attention_mask, n_heads=1):
    B, S, H = x.shape
    head_size = H // n_heads
    wq, bq, wk, bk, wv, bv, wd, bd = params
    q = x @ wq + bq
    k = x @ wk + bk
    v = x @ wv + bv
    scores = jnp.einsum('bsh,bth->bst', q, k) / math.sqrt(head_size)
    scores = scores + attention_mask
    probs = jax.nn.softmax(scores, axis=-1)
    ctx = jnp.einsum('bst,bth->bsh', probs, v)
    hidden = ctx @ wd + bd
    hidden = hidden * value_attention_mask
    return hidden, probs


def _init_params(key, hidden_size):
    """Deterministic PyTorch-Linear-like init; weights stored as (in, out)."""
    ks = jax.random.split(key, 8)
    bound = 1.0 / math.sqrt(hidden_size)
    def lin(kw, kb):
        w = jax.random.uniform(kw, (hidden_size, hidden_size),
                               jnp.float32, -bound, bound)
        b = jax.random.uniform(kb, (1, hidden_size), jnp.float32, -bound, bound)
        return w, b
    wq, bq = lin(ks[0], ks[1])
    wk, bk = lin(ks[2], ks[3])
    wv, bv = lin(ks[4], ks[5])
    wd, bd = lin(ks[6], ks[7])
    return (wq, bq, wk, bk, wv, bv, wd, bd)


if __name__ == "__main__":
    B, S, H = 4, 8, 32   # batch, max_set_len, hidden_size (small test shapes)

    key = jax.random.PRNGKey(0)
    k_x, k_p = jax.random.split(key, 2)

    x = jax.random.normal(k_x, (B, S, H), jnp.float32)
    params = _init_params(k_p, H)

    # Padding mask: some key positions invalid in batches 1 and 3.
    valid = jnp.ones((B, S), jnp.float32).at[1, -2:].set(0.0).at[3, -3:].set(0.0)
    key_attention_mask = (1.0 - valid) * -1e9                 # (B, S) additive key bias
    value_attention_mask = valid[:, :, None]                  # (B, S, 1)
    # Full (B, S, S) additive mask (only for the plain-JAX reference).
    attention_mask_full = jnp.broadcast_to(key_attention_mask[:, None, :], (B, S, S))

    ref_h, ref_p = _reference(x, params, attention_mask_full, value_attention_mask)

    # Default path: bf16 MXU operands (f32 accumulation), bf16 probs output.
    prepared = prepare_params(params, H)                       # one-time weight prep
    hidden_states, attention_probs = self_attention(
        x, prepared, key_attention_mask, value_attention_mask)
    jax.block_until_ready((hidden_states, attention_probs))
    assert jnp.allclose(hidden_states, ref_h, atol=5e-2, rtol=5e-2)
    assert jnp.allclose(attention_probs.astype(jnp.float32), ref_p, atol=5e-2, rtol=5e-2)

    # f32 MXU path (tighter numerical check of the kernel structure).
    prepared_f32 = prepare_params(params, H, matmul_dtype=jnp.float32)
    hidden_f32, probs_f32 = self_attention(
        x, prepared_f32, key_attention_mask, value_attention_mask,
        probs_dtype=jnp.float32)
    jax.block_until_ready((hidden_f32, probs_f32))
    assert jnp.allclose(hidden_f32, ref_h, atol=5e-3, rtol=5e-3)
    assert jnp.allclose(probs_f32, ref_p, atol=5e-3, rtol=5e-3)

    print("KERNEL_OK")
</pallas_src>

<mosaic_0001>
module attributes {stable_mosaic.version = 11 : i64} {
  func.func @_self_attention_kernel(%arg0: i32, %arg1: memref<1x8x32xf32, #tpu.memory_space<vmem>>, %arg2: memref<3x32x32xbf16, #tpu.memory_space<vmem>>, %arg3: memref<3x1x32xf32, #tpu.memory_space<vmem>>, %arg4: memref<32x32xbf16, #tpu.memory_space<vmem>>, %arg5: memref<1x32xf32, #tpu.memory_space<vmem>>, %arg6: memref<1x1x8xf32, #tpu.memory_space<vmem>>, %arg7: memref<1x8x1xf32, #tpu.memory_space<vmem>>, %arg8: memref<1x8x32xf32, #tpu.memory_space<vmem>>, %arg9: memref<1x8x8xbf16, #tpu.memory_space<vmem>>, %arg10: memref<3x8x32xbf16, #tpu.memory_space<vmem>>) attributes {dimension_semantics = [#tpu.dimension_semantics<parallel>], iteration_bounds = array<i64: 4>, scalar_prefetch = 0 : i64, scratch_operands = 1 : i64, tpu.core_type = #tpu.core_type<tc>, window_params = [{transform_indices = @transform_0, window_bounds = array<i64: 1, 8, 32>}, {pipeline_mode = #tpu.pipeline_mode<synchronous>, transform_indices = @transform_1, window_bounds = array<i64: 3, 32, 32>}, {pipeline_mode = #tpu.pipeline_mode<synchronous>, transform_indices = @transform_2, window_bounds = array<i64: 3, 1, 32>}, {pipeline_mode = #tpu.pipeline_mode<synchronous>, transform_indices = @transform_3, window_bounds = array<i64: 32, 32>}, {pipeline_mode = #tpu.pipeline_mode<synchronous>, transform_indices = @transform_4, window_bounds = array<i64: 1, 32>}, {transform_indices = @transform_5, window_bounds = array<i64: 1, 1, 8>}, {transform_indices = @transform_6, window_bounds = array<i64: 1, 8, 1>}, {transform_indices = @transform_7, window_bounds = array<i64: 1, 8, 32>}, {transform_indices = @transform_8, window_bounds = array<i64: 1, 8, 8>}]} {
    %c0 = arith.constant 0 : index
    %c0_0 = arith.constant 0 : index
    %c0_1 = arith.constant 0 : index
    %0 = vector.load %arg1[%c0, %c0_0, %c0_1] : memref<1x8x32xf32, #tpu.memory_space<vmem>>, vector<1x8x32xf32>
    %1 = vector.shape_cast %0 : vector<1x8x32xf32> to vector<8x32xf32>
    %2 = arith.truncf %1 : vector<8x32xf32> to vector<8x32xbf16>
    %c0_2 = arith.constant 0 : index
    %c0_3 = arith.constant 0 : index
    %c0_4 = arith.constant 0 : index
    %3 = vector.load %arg2[%c0_2, %c0_3, %c0_4] : memref<3x32x32xbf16, #tpu.memory_space<vmem>>, vector<1x32x32xbf16>
    %4 = vector.shape_cast %3 : vector<1x32x32xbf16> to vector<32x32xbf16>
    %cst = arith.constant dense<0.000000e+00> : vector<8x32xf32>
    %5 = tpu.matmul %2, %4, %cst {dimension_numbers = #tpu.dot_dimension_numbers<[1], [0], [0], [1], [0, 0, 1, 1], [], []>} : vector<8x32xbf16>, vector<32x32xbf16>, vector<8x32xf32> -> vector<8x32xf32>
    %c0_5 = arith.constant 0 : index
    %c0_6 = arith.constant 0 : index
    %c0_7 = arith.constant 0 : index
    %6 = vector.load %arg3[%c0_5, %c0_6, %c0_7] : memref<3x1x32xf32, #tpu.memory_space<vmem>>, vector<1x1x32xf32>
    %7 = vector.shape_cast %6 : vector<1x1x32xf32> to vector<1x32xf32>
    %8 = vector.broadcast %7 : vector<1x32xf32> to vector<8x32xf32>
    %9 = arith.addf %5, %8 : vector<8x32xf32>
    %10 = arith.truncf %9 : vector<8x32xf32> to vector<8x32xbf16>
    %c0_8 = arith.constant 0 : index
    %c0_9 = arith.constant 0 : index
    %c0_10 = arith.constant 0 : index
    %11 = vector.load %arg10[%c0_8, %c0_9, %c0_10] : memref<3x8x32xbf16, #tpu.memory_space<vmem>>, vector<1x8x32xbf16>
    %12 = vector.shape_cast %11 : vector<1x8x32xbf16> to vector<8x32xbf16>
    %13 = vector.shape_cast %10 : vector<8x32xbf16> to vector<1x8x32xbf16>
    tpu.vector_store %arg10[%c0_8, %c0_9, %c0_10], %13 {strides = array<i32>} : memref<3x8x32xbf16, #tpu.memory_space<vmem>>, vector<1x8x32xbf16>,
    %c1 = arith.constant 1 : index
    %c0_11 = arith.constant 0 : index
    %c0_12 = arith.constant 0 : index
    %14 = vector.load %arg2[%c1, %c0_11, %c0_12] : memref<3x32x32xbf16, #tpu.memory_space<vmem>>, vector<1x32x32xbf16>
    %15 = vector.shape_cast %14 : vector<1x32x32xbf16> to vector<32x32xbf16>
    %cst_13 = arith.constant dense<0.000000e+00> : vector<8x32xf32>
    %16 = tpu.matmul %2, %15, %cst_13 {dimension_numbers = #tpu.dot_dimension_numbers<[1], [0], [0], [1], [0, 0, 1, 1], [], []>} : vector<8x32xbf16>, vector<32x32xbf16>, vector<8x32xf32> -> vector<8x32xf32>
    %c1_14 = arith.constant 1 : index
    %c0_15 = arith.constant 0 : index
    %c0_16 = arith.constant 0 : index
    %17 = vector.load %arg3[%c1_14, %c0_15, %c0_16] : memref<3x1x32xf32, #tpu.memory_space<vmem>>, vector<1x1x32xf32>
    %18 = vector.shape_cast %17 : vector<1x1x32xf32> to vector<1x32xf32>
    %19 = vector.broadcast %18 : vector<1x32xf32> to vector<8x32xf32>
    %20 = arith.addf %16, %19 : vector<8x32xf32>
    %21 = arith.truncf %20 : vector<8x32xf32> to vector<8x32xbf16>
    %c1_17 = arith.constant 1 : index
    %c0_18 = arith.constant 0 : index
    %c0_19 = arith.constant 0 : index
    %22 = vector.load %arg10[%c1_17, %c0_18, %c0_19] : memref<3x8x32xbf16, #tpu.memory_space<vmem>>, vector<1x8x32xbf16>
    %23 = vector.shape_cast %22 : vector<1x8x32xbf16> to vector<8x32xbf16>
    %24 = vector.shape_cast %21 : vector<8x32xbf16> to vector<1x8x32xbf16>
    tpu.vector_store %arg10[%c1_17, %c0_18, %c0_19], %24 {strides = array<i32>} : memref<3x8x32xbf16, #tpu.memory_space<vmem>>, vector<1x8x32xbf16>,
    %c2 = arith.constant 2 : index
    %c0_20 = arith.constant 0 : index
    %c0_21 = arith.constant 0 : index
    %25 = vector.load %arg2[%c2, %c0_20, %c0_21] : memref<3x32x32xbf16, #tpu.memory_space<vmem>>, vector<1x32x32xbf16>
    %26 = vector.shape_cast %25 : vector<1x32x32xbf16> to vector<32x32xbf16>
    %cst_22 = arith.constant dense<0.000000e+00> : vector<8x32xf32>
    %27 = tpu.matmul %2, %26, %cst_22 {dimension_numbers = #tpu.dot_dimension_numbers<[1], [0], [0], [1], [0, 0, 1, 1], [], []>} : vector<8x32xbf16>, vector<32x32xbf16>, vector<8x32xf32> -> vector<8x32xf32>
    %c2_23 = arith.constant 2 : index
    %c0_24 = arith.constant 0 : index
    %c0_25 = arith.constant 0 : index
    %28 = vector.load %arg3[%c2_23, %c0_24, %c0_25] : memref<3x1x32xf32, #tpu.memory_space<vmem>>, vector<1x1x32xf32>
    %29 = vector.shape_cast %28 : vector<1x1x32xf32> to vector<1x32xf32>
    %30 = vector.broadcast %29 : vector<1x32xf32> to vector<8x32xf32>
    %31 = arith.addf %27, %30 : vector<8x32xf32>
    %32 = arith.truncf %31 : vector<8x32xf32> to vector<8x32xbf16>
    %c2_26 = arith.constant 2 : index
    %c0_27 = arith.constant 0 : index
    %c0_28 = arith.constant 0 : index
    %33 = vector.load %arg10[%c2_26, %c0_27, %c0_28] : memref<3x8x32xbf16, #tpu.memory_space<vmem>>, vector<1x8x32xbf16>
    %34 = vector.shape_cast %33 : vector<1x8x32xbf16> to vector<8x32xbf16>
    %35 = vector.shape_cast %32 : vector<8x32xbf16> to vector<1x8x32xbf16>
    tpu.vector_store %arg10[%c2_26, %c0_27, %c0_28], %35 {strides = array<i32>} : memref<3x8x32xbf16, #tpu.memory_space<vmem>>, vector<1x8x32xbf16>,
    %c0_29 = arith.constant 0 : index
    %c0_30 = arith.constant 0 : index
    %c0_31 = arith.constant 0 : index
    %36 = vector.load %arg10[%c0_29, %c0_30, %c0_31] : memref<3x8x32xbf16, #tpu.memory_space<vmem>>, vector<1x8x32xbf16>
    %37 = vector.shape_cast %36 : vector<1x8x32xbf16> to vector<8x32xbf16>
    %38 = vector.shape_cast %37 : vector<8x32xbf16> to vector<1x8x32xbf16>
    %c1_32 = arith.constant 1 : index
    %c0_33 = arith.constant 0 : index
    %c0_34 = arith.constant 0 : index
    %39 = vector.load %arg10[%c1_32, %c0_33, %c0_34] : memref<3x8x32xbf16, #tpu.memory_space<vmem>>, vector<1x8x32xbf16>
    %40 = vector.shape_cast %39 : vector<1x8x32xbf16> to vector<8x32xbf16>
    %41 = vector.shape_cast %40 : vector<8x32xbf16> to vector<1x8x32xbf16>
    %c2_35 = arith.constant 2 : index
    %c0_36 = arith.constant 0 : index
    %c0_37 = arith.constant 0 : index
    %42 = vector.load %arg10[%c2_35, %c0_36, %c0_37] : memref<3x8x32xbf16, #tpu.memory_space<vmem>>, vector<1x8x32xbf16>
    %43 = vector.shape_cast %42 : vector<1x8x32xbf16> to vector<8x32xbf16>
    %44 = vector.shape_cast %43 : vector<8x32xbf16> to vector<1x8x32xbf16>
    "tpu.trace_start"() <{level = 10 : i32, message = "bqd,bkd->bqk"}> : () -> ()
    %cst_38 = arith.constant dense<0.000000e+00> : vector<1x8x8xf32>
    %45 = tpu.matmul %38, %41, %cst_38 {dimension_numbers = #tpu.dot_dimension_numbers<[2], [2], [1], [1], [0, 0, 0, 1, 1, 1], [0], [0]>} : vector<1x8x32xbf16>, vector<1x8x32xbf16>, vector<1x8x8xf32> -> vector<1x8x8xf32>
    "tpu.trace_stop"() : () -> ()
    %c0_39 = arith.constant 0 : index
    %c0_40 = arith.constant 0 : index
    %c0_41 = arith.constant 0 : index
    %46 = vector.load %arg6[%c0_39, %c0_40, %c0_41] : memref<1x1x8xf32, #tpu.memory_space<vmem>>, vector<1x1x8xf32>
    %47 = vector.broadcast %46 : vector<1x1x8xf32> to vector<1x8x8xf32>
    %48 = arith.addf %45, %47 : vector<1x8x8xf32>
    %cst_42 = arith.constant dense<0xFF800000> : vector<1x8xf32>
    %49 = vector.multi_reduction <maximumf>, %48, %cst_42 [2] : vector<1x8x8xf32> to vector<1x8xf32>
    %50 = vector.shape_cast %49 : vector<1x8xf32> to vector<1x8x1xf32>
    %51 = vector.broadcast %50 : vector<1x8x1xf32> to vector<1x8x8xf32>
    %52 = arith.subf %48, %51 : vector<1x8x8xf32>
    %53 = math.exp %52 : vector<1x8x8xf32>
    %cst_43 = arith.constant dense<0.000000e+00> : vector<1x8xf32>
    %54 = vector.multi_reduction <add>, %53, %cst_43 [2] : vector<1x8x8xf32> to vector<1x8xf32>
    %55 = vector.shape_cast %54 : vector<1x8xf32> to vector<1x8x1xf32>
    %56 = tpu.reciprocal %55 : vector<1x8x1xf32> -> vector<1x8x1xf32>
    %57 = vector.broadcast %56 : vector<1x8x1xf32> to vector<1x8x8xf32>
    %58 = arith.mulf %53, %57 : vector<1x8x8xf32>
    %59 = arith.truncf %58 : vector<1x8x8xf32> to vector<1x8x8xbf16>
    %c0_44 = arith.constant 0 : index
    %c0_45 = arith.constant 0 : index
    %c0_46 = arith.constant 0 : index
    %60 = vector.load %arg9[%c0_44, %c0_45, %c0_46] : memref<1x8x8xbf16, #tpu.memory_space<vmem>>, vector<1x8x8xbf16>
    tpu.vector_store %arg9[%c0_44, %c0_45, %c0_46], %59 {strides = array<i32>} : memref<1x8x8xbf16, #tpu.memory_space<vmem>>, vector<1x8x8xbf16>,
    %61 = tpu.reciprocal %55 {approx = true} : vector<1x8x1xf32> -> vector<1x8x1xf32>
    %62 = vector.broadcast %61 : vector<1x8x1xf32> to vector<1x8x8xf32>
    %63 = arith.mulf %53, %62 : vector<1x8x8xf32>
    %64 = arith.truncf %63 : vector<1x8x8xf32> to vector<1x8x8xbf16>
    "tpu.trace_start"() <{level = 10 : i32, message = "bqk,bkd->bqd"}> : () -> ()
    %cst_47 = arith.constant dense<0.000000e+00> : vector<1x8x32xf32>
    %65 = tpu.matmul %64, %44, %cst_47 {dimension_numbers = #tpu.dot_dimension_numbers<[2], [1], [1], [2], [0, 0, 0, 1, 1, 2], [0], [0]>} : vector<1x8x8xbf16>, vector<1x8x32xbf16>, vector<1x8x32xf32> -> vector<1x8x32xf32>
    "tpu.trace_stop"() : () -> ()
    %66 = vector.shape_cast %65 : vector<1x8x32xf32> to vector<8x32xf32>
    %67 = arith.truncf %66 : vector<8x32xf32> to vector<8x32xbf16>
    %c0_48 = arith.constant 0 : index
    %c0_49 = arith.constant 0 : index
    %68 = vector.load %arg4[%c0_48, %c0_49] : memref<32x32xbf16, #tpu.memory_space<vmem>>, vector<32x32xbf16>
    %cst_50 = arith.constant dense<0.000000e+00> : vector<8x32xf32>
    %69 = tpu.matmul %67, %68, %cst_50 {dimension_numbers = #tpu.dot_dimension_numbers<[1], [0], [0], [1], [0, 0, 1, 1], [], []>} : vector<8x32xbf16>, vector<32x32xbf16>, vector<8x32xf32> -> vector<8x32xf32>
    %c0_51 = arith.constant 0 : index
    %c0_52 = arith.constant 0 : index
    %70 = vector.load %arg5[%c0_51, %c0_52] : memref<1x32xf32, #tpu.memory_space<vmem>>, vector<1x32xf32>
    %71 = vector.broadcast %70 : vector<1x32xf32> to vector<8x32xf32>
    %72 = arith.addf %69, %71 : vector<8x32xf32>
    %73 = vector.shape_cast %72 : vector<8x32xf32> to vector<1x8x32xf32>
    %c0_53 = arith.constant 0 : index
    %c0_54 = arith.constant 0 : index
    %c0_55 = arith.constant 0 : index
    %74 = vector.load %arg7[%c0_53, %c0_54, %c0_55] : memref<1x8x1xf32, #tpu.memory_space<vmem>>, vector<1x8x1xf32>
    %75 = vector.broadcast %74 : vector<1x8x1xf32> to vector<1x8x32xf32>
    %76 = arith.mulf %73, %75 : vector<1x8x32xf32>
    %c0_56 = arith.constant 0 : index
    %c0_57 = arith.constant 0 : index
    %c0_58 = arith.constant 0 : index
    %77 = vector.load %arg8[%c0_56, %c0_57, %c0_58] : memref<1x8x32xf32, #tpu.memory_space<vmem>>, vector<1x8x32xf32>
    tpu.vector_store %arg8[%c0_56, %c0_57, %c0_58], %76 {strides = array<i32>} : memref<1x8x32xf32, #tpu.memory_space<vmem>>, vector<1x8x32xf32>,
    return
  }
  func.func @transform_0(%arg0: i32) -> (i32, i32, i32) {
    %c0_i32 = arith.constant 0 : i32
    %c0_i32_0 = arith.constant 0 : i32
    %c0_i32_1 = arith.constant 0 : i32
    return %arg0, %c0_i32, %c0_i32_0 : i32, i32, i32
  }
  func.func @transform_1(%arg0: i32) -> (i32, i32, i32) {
    %c0_i32 = arith.constant 0 : i32
    %c0_i32_0 = arith.constant 0 : i32
    %c0_i32_1 = arith.constant 0 : i32
    %c0_i32_2 = arith.constant 0 : i32
    return %c0_i32, %c0_i32_0, %c0_i32_1 : i32, i32, i32
  }
  func.func @transform_2(%arg0: i32) -> (i32, i32, i32) {
    %c0_i32 = arith.constant 0 : i32
    %c0_i32_0 = arith.constant 0 : i32
    %c0_i32_1 = arith.constant 0 : i32
    %c0_i32_2 = arith.constant 0 : i32
    return %c0_i32, %c0_i32_0, %c0_i32_1 : i32, i32, i32
  }
  func.func @transform_3(%arg0: i32) -> (i32, i32) {
    %c0_i32 = arith.constant 0 : i32
    %c0_i32_0 = arith.constant 0 : i32
    %c0_i32_1 = arith.constant 0 : i32
    return %c0_i32, %c0_i32_0 : i32, i32
  }
  func.func @transform_4(%arg0: i32) -> (i32, i32) {
    %c0_i32 = arith.constant 0 : i32
    %c0_i32_0 = arith.constant 0 : i32
    %c0_i32_1 = arith.constant 0 : i32
    return %c0_i32, %c0_i32_0 : i32, i32
  }
  func.func @transform_5(%arg0: i32) -> (i32, i32, i32) {
    %c0_i32 = arith.constant 0 : i32
    %c0_i32_0 = arith.constant 0 : i32
    %c0_i32_1 = arith.constant 0 : i32
    return %arg0, %c0_i32, %c0_i32_0 : i32, i32, i32
  }
  func.func @transform_6(%arg0: i32) -> (i32, i32, i32) {
    %c0_i32 = arith.constant 0 : i32
    %c0_i32_0 = arith.constant 0 : i32
    %c0_i32_1 = arith.constant 0 : i32
    return %arg0, %c0_i32, %c0_i32_0 : i32, i32, i32
  }
  func.func @transform_7(%arg0: i32) -> (i32, i32, i32) {
    %c0_i32 = arith.constant 0 : i32
    %c0_i32_0 = arith.constant 0 : i32
    %c0_i32_1 = arith.constant 0 : i32
    return %arg0, %c0_i32, %c0_i32_0 : i32, i32, i32
  }
  func.func @transform_8(%arg0: i32) -> (i32, i32, i32) {
    %c0_i32 = arith.constant 0 : i32
    %c0_i32_0 = arith.constant 0 : i32
    %c0_i32_1 = arith.constant 0 : i32
    return %arg0, %c0_i32, %c0_i32_0 : i32, i32, i32
  }
}

module attributes {stable_mosaic.version = 11 : i64} {
  func.func @_self_attention_kernel(%arg0: i32, %arg1: memref<1x8x32xf32, #tpu.memory_space<vmem>>, %arg2: memref<3x32x32xbf16, #tpu.memory_space<vmem>>, %arg3: memref<3x1x32xf32, #tpu.memory_space<vmem>>, %arg4: memref<32x32xbf16, #tpu.memory_space<vmem>>, %arg5: memref<1x32xf32, #tpu.memory_space<vmem>>, %arg6: memref<1x1x8xf32, #tpu.memory_space<vmem>>, %arg7: memref<1x8x1xf32, #tpu.memory_space<vmem>>, %arg8: memref<1x8x32xf32, #tpu.memory_space<vmem>>, %arg9: memref<1x8x8xbf16, #tpu.memory_space<vmem>>, %arg10: memref<3x8x32xbf16, #tpu.memory_space<vmem>>) attributes {dimension_semantics = [#tpu.dimension_semantics<parallel>], iteration_bounds = array<i64: 4>, scalar_prefetch = 0 : i64, scratch_operands = 1 : i64, tpu.core_type = #tpu.core_type<tc>, window_params = [{transform_indices = @transform_0, window_bounds = array<i64: 1, 8, 32>}, {pipeline_mode = #tpu.pipeline_mode<synchronous>, transform_indices = @transform_1, window_bounds = array<i64: 3, 32, 32>}, {pipeline_mode = #tpu.pipeline_mode<synchronous>, transform_indices = @transform_2, window_bounds = array<i64: 3, 1, 32>}, {pipeline_mode = #tpu.pipeline_mode<synchronous>, transform_indices = @transform_3, window_bounds = array<i64: 32, 32>}, {pipeline_mode = #tpu.pipeline_mode<synchronous>, transform_indices = @transform_4, window_bounds = array<i64: 1, 32>}, {transform_indices = @transform_5, window_bounds = array<i64: 1, 1, 8>}, {transform_indices = @transform_6, window_bounds = array<i64: 1, 8, 1>}, {transform_indices = @transform_7, window_bounds = array<i64: 1, 8, 32>}, {transform_indices = @transform_8, window_bounds = array<i64: 1, 8, 8>}]} {
    %c0 = arith.constant 0 : index
    %c0_0 = arith.constant 0 : index
    %c0_1 = arith.constant 0 : index
    %0 = vector.load %arg1[%c0, %c0_0, %c0_1] : memref<1x8x32xf32, #tpu.memory_space<vmem>>, vector<1x8x32xf32>
    %1 = vector.shape_cast %0 : vector<1x8x32xf32> to vector<8x32xf32>
    %2 = arith.truncf %1 : vector<8x32xf32> to vector<8x32xbf16>
    %c0_2 = arith.constant 0 : index
    %c0_3 = arith.constant 0 : index
    %c0_4 = arith.constant 0 : index
    %3 = vector.load %arg2[%c0_2, %c0_3, %c0_4] : memref<3x32x32xbf16, #tpu.memory_space<vmem>>, vector<1x32x32xbf16>
    %4 = vector.shape_cast %3 : vector<1x32x32xbf16> to vector<32x32xbf16>
    %cst = arith.constant dense<0.000000e+00> : vector<8x32xf32>
    %5 = tpu.matmul %2, %4, %cst {dimension_numbers = #tpu.dot_dimension_numbers<[1], [0], [0], [1], [0, 0, 1, 1], [], []>} : vector<8x32xbf16>, vector<32x32xbf16>, vector<8x32xf32> -> vector<8x32xf32>
    %c0_5 = arith.constant 0 : index
    %c0_6 = arith.constant 0 : index
    %c0_7 = arith.constant 0 : index
    %6 = vector.load %arg3[%c0_5, %c0_6, %c0_7] : memref<3x1x32xf32, #tpu.memory_space<vmem>>, vector<1x1x32xf32>
    %7 = vector.shape_cast %6 : vector<1x1x32xf32> to vector<1x32xf32>
    %8 = vector.broadcast %7 : vector<1x32xf32> to vector<8x32xf32>
    %9 = arith.addf %5, %8 : vector<8x32xf32>
    %10 = arith.truncf %9 : vector<8x32xf32> to vector<8x32xbf16>
    %c0_8 = arith.constant 0 : index
    %c0_9 = arith.constant 0 : index
    %c0_10 = arith.constant 0 : index
    %11 = vector.load %arg10[%c0_8, %c0_9, %c0_10] : memref<3x8x32xbf16, #tpu.memory_space<vmem>>, vector<1x8x32xbf16>
    %12 = vector.shape_cast %11 : vector<1x8x32xbf16> to vector<8x32xbf16>
    %13 = vector.shape_cast %10 : vector<8x32xbf16> to vector<1x8x32xbf16>
    tpu.vector_store %arg10[%c0_8, %c0_9, %c0_10], %13 {strides = array<i32>} : memref<3x8x32xbf16, #tpu.memory_space<vmem>>, vector<1x8x32xbf16>,
    %c1 = arith.constant 1 : index
    %c0_11 = arith.constant 0 : index
    %c0_12 = arith.constant 0 : index
    %14 = vector.load %arg2[%c1, %c0_11, %c0_12] : memref<3x32x32xbf16, #tpu.memory_space<vmem>>, vector<1x32x32xbf16>
    %15 = vector.shape_cast %14 : vector<1x32x32xbf16> to vector<32x32xbf16>
    %cst_13 = arith.constant dense<0.000000e+00> : vector<8x32xf32>
    %16 = tpu.matmul %2, %15, %cst_13 {dimension_numbers = #tpu.dot_dimension_numbers<[1], [0], [0], [1], [0, 0, 1, 1], [], []>} : vector<8x32xbf16>, vector<32x32xbf16>, vector<8x32xf32> -> vector<8x32xf32>
    %c1_14 = arith.constant 1 : index
    %c0_15 = arith.constant 0 : index
    %c0_16 = arith.constant 0 : index
    %17 = vector.load %arg3[%c1_14, %c0_15, %c0_16] : memref<3x1x32xf32, #tpu.memory_space<vmem>>, vector<1x1x32xf32>
    %18 = vector.shape_cast %17 : vector<1x1x32xf32> to vector<1x32xf32>
    %19 = vector.broadcast %18 : vector<1x32xf32> to vector<8x32xf32>
    %20 = arith.addf %16, %19 : vector<8x32xf32>
    %21 = arith.truncf %20 : vector<8x32xf32> to vector<8x32xbf16>
    %c1_17 = arith.constant 1 : index
    %c0_18 = arith.constant 0 : index
    %c0_19 = arith.constant 0 : index
    %22 = vector.load %arg10[%c1_17, %c0_18, %c0_19] : memref<3x8x32xbf16, #tpu.memory_space<vmem>>, vector<1x8x32xbf16>
    %23 = vector.shape_cast %22 : vector<1x8x32xbf16> to vector<8x32xbf16>
    %24 = vector.shape_cast %21 : vector<8x32xbf16> to vector<1x8x32xbf16>
    tpu.vector_store %arg10[%c1_17, %c0_18, %c0_19], %24 {strides = array<i32>} : memref<3x8x32xbf16, #tpu.memory_space<vmem>>, vector<1x8x32xbf16>,
    %c2 = arith.constant 2 : index
    %c0_20 = arith.constant 0 : index
    %c0_21 = arith.constant 0 : index
    %25 = vector.load %arg2[%c2, %c0_20, %c0_21] : memref<3x32x32xbf16, #tpu.memory_space<vmem>>, vector<1x32x32xbf16>
    %26 = vector.shape_cast %25 : vector<1x32x32xbf16> to vector<32x32xbf16>
    %cst_22 = arith.constant dense<0.000000e+00> : vector<8x32xf32>
    %27 = tpu.matmul %2, %26, %cst_22 {dimension_numbers = #tpu.dot_dimension_numbers<[1], [0], [0], [1], [0, 0, 1, 1], [], []>} : vector<8x32xbf16>, vector<32x32xbf16>, vector<8x32xf32> -> vector<8x32xf32>
    %c2_23 = arith.constant 2 : index
    %c0_24 = arith.constant 0 : index
    %c0_25 = arith.constant 0 : index
    %28 = vector.load %arg3[%c2_23, %c0_24, %c0_25] : memref<3x1x32xf32, #tpu.memory_space<vmem>>, vector<1x1x32xf32>
    %29 = vector.shape_cast %28 : vector<1x1x32xf32> to vector<1x32xf32>
    %30 = vector.broadcast %29 : vector<1x32xf32> to vector<8x32xf32>
    %31 = arith.addf %27, %30 : vector<8x32xf32>
    %32 = arith.truncf %31 : vector<8x32xf32> to vector<8x32xbf16>
    %c2_26 = arith.constant 2 : index
    %c0_27 = arith.constant 0 : index
    %c0_28 = arith.constant 0 : index
    %33 = vector.load %arg10[%c2_26, %c0_27, %c0_28] : memref<3x8x32xbf16, #tpu.memory_space<vmem>>, vector<1x8x32xbf16>
    %34 = vector.shape_cast %33 : vector<1x8x32xbf16> to vector<8x32xbf16>
    %35 = vector.shape_cast %32 : vector<8x32xbf16> to vector<1x8x32xbf16>
    tpu.vector_store %arg10[%c2_26, %c0_27, %c0_28], %35 {strides = array<i32>} : memref<3x8x32xbf16, #tpu.memory_space<vmem>>, vector<1x8x32xbf16>,
    %c0_29 = arith.constant 0 : index
    %c0_30 = arith.constant 0 : index
    %c0_31 = arith.constant 0 : index
    %36 = vector.load %arg10[%c0_29, %c0_30, %c0_31] : memref<3x8x32xbf16, #tpu.memory_space<vmem>>, vector<1x8x32xbf16>
    %37 = vector.shape_cast %36 : vector<1x8x32xbf16> to vector<8x32xbf16>
    %38 = vector.shape_cast %37 : vector<8x32xbf16> to vector<1x8x32xbf16>
    %c1_32 = arith.constant 1 : index
    %c0_33 = arith.constant 0 : index
    %c0_34 = arith.constant 0 : index
    %39 = vector.load %arg10[%c1_32, %c0_33, %c0_34] : memref<3x8x32xbf16, #tpu.memory_space<vmem>>, vector<1x8x32xbf16>
    %40 = vector.shape_cast %39 : vector<1x8x32xbf16> to vector<8x32xbf16>
    %41 = vector.shape_cast %40 : vector<8x32xbf16> to vector<1x8x32xbf16>
    %c2_35 = arith.constant 2 : index
    %c0_36 = arith.constant 0 : index
    %c0_37 = arith.constant 0 : index
    %42 = vector.load %arg10[%c2_35, %c0_36, %c0_37] : memref<3x8x32xbf16, #tpu.memory_space<vmem>>, vector<1x8x32xbf16>
    %43 = vector.shape_cast %42 : vector<1x8x32xbf16> to vector<8x32xbf16>
    %44 = vector.shape_cast %43 : vector<8x32xbf16> to vector<1x8x32xbf16>
    "tpu.trace_start"() <{level = 10 : i32, message = "bqd,bkd->bqk"}> : () -> ()
    %cst_38 = arith.constant dense<0.000000e+00> : vector<1x8x8xf32>
    %45 = tpu.matmul %38, %41, %cst_38 {dimension_numbers = #tpu.dot_dimension_numbers<[2], [2], [1], [1], [0, 0, 0, 1, 1, 1], [0], [0]>} : vector<1x8x32xbf16>, vector<1x8x32xbf16>, vector<1x8x8xf32> -> vector<1x8x8xf32>
    "tpu.trace_stop"() : () -> ()
    %c0_39 = arith.constant 0 : index
    %c0_40 = arith.constant 0 : index
    %c0_41 = arith.constant 0 : index
    %46 = vector.load %arg6[%c0_39, %c0_40, %c0_41] : memref<1x1x8xf32, #tpu.memory_space<vmem>>, vector<1x1x8xf32>
    %47 = vector.broadcast %46 : vector<1x1x8xf32> to vector<1x8x8xf32>
    %48 = arith.addf %45, %47 : vector<1x8x8xf32>
    %cst_42 = arith.constant dense<0xFF800000> : vector<1x8xf32>
    %49 = vector.multi_reduction <maximumf>, %48, %cst_42 [2] : vector<1x8x8xf32> to vector<1x8xf32>
    %50 = vector.shape_cast %49 : vector<1x8xf32> to vector<1x8x1xf32>
    %51 = vector.broadcast %50 : vector<1x8x1xf32> to vector<1x8x8xf32>
    %52 = arith.subf %48, %51 : vector<1x8x8xf32>
    %53 = math.exp %52 : vector<1x8x8xf32>
    %cst_43 = arith.constant dense<0.000000e+00> : vector<1x8xf32>
    %54 = vector.multi_reduction <add>, %53, %cst_43 [2] : vector<1x8x8xf32> to vector<1x8xf32>
    %55 = vector.shape_cast %54 : vector<1x8xf32> to vector<1x8x1xf32>
    %56 = tpu.reciprocal %55 : vector<1x8x1xf32> -> vector<1x8x1xf32>
    %57 = vector.broadcast %56 : vector<1x8x1xf32> to vector<1x8x8xf32>
    %58 = arith.mulf %53, %57 : vector<1x8x8xf32>
    %59 = arith.truncf %58 : vector<1x8x8xf32> to vector<1x8x8xbf16>
    %c0_44 = arith.constant 0 : index
    %c0_45 = arith.constant 0 : index
    %c0_46 = arith.constant 0 : index
    %60 = vector.load %arg9[%c0_44, %c0_45, %c0_46] : memref<1x8x8xbf16, #tpu.memory_space<vmem>>, vector<1x8x8xbf16>
    tpu.vector_store %arg9[%c0_44, %c0_45, %c0_46], %59 {strides = array<i32>} : memref<1x8x8xbf16, #tpu.memory_space<vmem>>, vector<1x8x8xbf16>,
    %61 = tpu.reciprocal %55 {approx = true} : vector<1x8x1xf32> -> vector<1x8x1xf32>
    %62 = vector.broadcast %61 : vector<1x8x1xf32> to vector<1x8x8xf32>
    %63 = arith.mulf %53, %62 : vector<1x8x8xf32>
    %64 = arith.truncf %63 : vector<1x8x8xf32> to vector<1x8x8xbf16>
    "tpu.trace_start"() <{level = 10 : i32, message = "bqk,bkd->bqd"}> : () -> ()
    %cst_47 = arith.constant dense<0.000000e+00> : vector<1x8x32xf32>
    %65 = tpu.matmul %64, %44, %cst_47 {dimension_numbers = #tpu.dot_dimension_numbers<[2], [1], [1], [2], [0, 0, 0, 1, 1, 2], [0], [0]>} : vector<1x8x8xbf16>, vector<1x8x32xbf16>, vector<1x8x32xf32> -> vector<1x8x32xf32>
    "tpu.trace_stop"() : () -> ()
    %66 = vector.shape_cast %65 : vector<1x8x32xf32> to vector<8x32xf32>
    %67 = arith.truncf %66 : vector<8x32xf32> to vector<8x32xbf16>
    %c0_48 = arith.constant 0 : index
    %c0_49 = arith.constant 0 : index
    %68 = vector.load %arg4[%c0_48, %c0_49] : memref<32x32xbf16, #tpu.memory_space<vmem>>, vector<32x32xbf16>
    %cst_50 = arith.constant dense<0.000000e+00> : vector<8x32xf32>
    %69 = tpu.matmul %67, %68, %cst_50 {dimension_numbers = #tpu.dot_dimension_numbers<[1], [0], [0], [1], [0, 0, 1, 1], [], []>} : vector<8x32xbf16>, vector<32x32xbf16>, vector<8x32xf32> -> vector<8x32xf32>
    %c0_51 = arith.constant 0 : index
    %c0_52 = arith.constant 0 : index
    %70 = vector.load %arg5[%c0_51, %c0_52] : memref<1x32xf32, #tpu.memory_space<vmem>>, vector<1x32xf32>
    %71 = vector.broadcast %70 : vector<1x32xf32> to vector<8x32xf32>
    %72 = arith.addf %69, %71 : vector<8x32xf32>
    %73 = vector.shape_cast %72 : vector<8x32xf32> to vector<1x8x32xf32>
    %c0_53 = arith.constant 0 : index
    %c0_54 = arith.constant 0 : index
    %c0_55 = arith.constant 0 : index
    %74 = vector.load %arg7[%c0_53, %c0_54, %c0_55] : memref<1x8x1xf32, #tpu.memory_space<vmem>>, vector<1x8x1xf32>
    %75 = vector.broadcast %74 : vector<1x8x1xf32> to vector<1x8x32xf32>
    %76 = arith.mulf %73, %75 : vector<1x8x32xf32>
    %c0_56 = arith.constant 0 : index
    %c0_57 = arith.constant 0 : index
    %c0_58 = arith.constant 0 : index
    %77 = vector.load %arg8[%c0_56, %c0_57, %c0_58] : memref<1x8x32xf32, #tpu.memory_space<vmem>>, vector<1x8x32xf32>
    tpu.vector_store %arg8[%c0_56, %c0_57, %c0_58], %76 {strides = array<i32>} : memref<1x8x32xf32, #tpu.memory_space<vmem>>, vector<1x8x32xf32>,
    return
  }
  func.func @transform_0(%arg0: i32) -> (i32, i32, i32) {
    %c0_i32 = arith.constant 0 : i32
    %c0_i32_0 = arith.constant 0 : i32
    %c0_i32_1 = arith.constant 0 : i32
    return %arg0, %c0_i32, %c0_i32_0 : i32, i32, i32
  }
  func.func @transform_1(%arg0: i32) -> (i32, i32, i32) {
    %c0_i32 = arith.constant 0 : i32
    %c0_i32_0 = arith.constant 0 : i32
    %c0_i32_1 = arith.constant 0 : i32
    %c0_i32_2 = arith.constant 0 : i32
    return %c0_i32, %c0_i32_0, %c0_i32_1 : i32, i32, i32
  }
  func.func @transform_2(%arg0: i32) -> (i32, i32, i32) {
    %c0_i32 = arith.constant 0 : i32
    %c0_i32_0 = arith.constant 0 : i32
    %c0_i32_1 = arith.constant 0 : i32
    %c0_i32_2 = arith.constant 0 : i32
    return %c0_i32, %c0_i32_0, %c0_i32_1 : i32, i32, i32
  }
  func.func @transform_3(%arg0: i32) -> (i32, i32) {
    %c0_i32 = arith.constant 0 : i32
    %c0_i32_0 = arith.constant 0 : i32
    %c0_i32_1 = arith.constant 0 : i32
    return %c0_i32, %c0_i32_0 : i32, i32
  }
  func.func @transform_4(%arg0: i32) -> (i32, i32) {
    %c0_i32 = arith.constant 0 : i32
    %c0_i32_0 = arith.constant 0 : i32
    %c0_i32_1 = arith.constant 0 : i32
    return %c0_i32, %c0_i32_0 : i32, i32
  }
  func.func @transform_5(%arg0: i32) -> (i32, i32, i32) {
    %c0_i32 = arith.constant 0 : i32
    %c0_i32_0 = arith.constant 0 : i32
    %c0_i32_1 = arith.constant 0 : i32
    return %arg0, %c0_i32, %c0_i32_0 : i32, i32, i32
  }
  func.func @transform_6(%arg0: i32) -> (i32, i32, i32) {
    %c0_i32 = arith.constant 0 : i32
    %c0_i32_0 = arith.constant 0 : i32
    %c0_i32_1 = arith.constant 0 : i32
    return %arg0, %c0_i32, %c0_i32_0 : i32, i32, i32
  }
  func.func @transform_7(%arg0: i32) -> (i32, i32, i32) {
    %c0_i32 = arith.constant 0 : i32
    %c0_i32_0 = arith.constant 0 : i32
    %c0_i32_1 = arith.constant 0 : i32
    return %arg0, %c0_i32, %c0_i32_0 : i32, i32, i32
  }
  func.func @transform_8(%arg0: i32) -> (i32, i32, i32) {
    %c0_i32 = arith.constant 0 : i32
    %c0_i32_0 = arith.constant 0 : i32
    %c0_i32_1 = arith.constant 0 : i32
    return %arg0, %c0_i32, %c0_i32_0 : i32, i32, i32
  }
}

</mosaic_0001>

<llo_original>
// kernel: tpu_custom_call.1
$region0: #{tpu_custom_call.1}
  #allocation0 [shape = 'u32[]', space=smem, size = 0x4, offset = 0x4, fixed_abs, tag = 'smem constant byte address 0x4 - core index']
  #allocation1 [shape = 'u32[72,128]{1,0:T(1,128)}', space=vmem, size = 0x9000, scoped, tag = 'internal scratch']
  #allocation2 [shape = 'bf16[3,8,32]{2,1,0:T(8,128)(2,1)}', space=vmem, size = 0x1800, scoped, tag = 'scratch operand']
  %s0 = inlined_call_operand.vmem [shape: f32[4,8,32], index: 0, kind: input, shape index: {}]
  %s1 = inlined_call_operand.hbm [shape: bf16[3,32,32], index: 1, kind: input, shape index: {}]
  %s2 = inlined_call_operand.hbm [shape: f32[3,1,32], index: 2, kind: input, shape index: {}]
  %s3 = inlined_call_operand.hbm [shape: bf16[32,32], index: 3, kind: input, shape index: {}]
  %s4 = inlined_call_operand.vmem [shape: f32[1,32], index: 4, kind: input, shape index: {}]
  %s5 = inlined_call_operand.vmem [shape: f32[4,1,8], index: 5, kind: input, shape index: {}]
  %s6 = inlined_call_operand.vmem [shape: f32[4,8,1], index: 6, kind: input, shape index: {}]
  %s7 = inlined_call_operand.hbm [shape: f32[4,8,32], index: 7, kind: output, shape index: {0}]
  %s8 = inlined_call_operand.hbm [shape: bf16[4,8,8], index: 8, kind: output, shape index: {1}]
  %9 = xla_tuple %s7, %s8
  %s10 = sld [smem:[#allocation0]]
  $region81: #{tpu_custom_call.1} parent=0
    _
  %s12 = ssub.s32 1, %s10
  %s13 = scalar_select 0, %s12, %s10
  $region1: #{tpu_custom_call.1} parent=0
    #allocation3 [shape = 'u8[24576]{0}', space=vmem, size = 0x6000, scoped, tag = 'input window, operand 1, single buffered']
    #allocation4 [shape = 's32[2]{0}', space=sflag, size = 0x8, scoped, tag = 'scoped memory for tpu_custom_call.1']
    #allocation5 [shape = 's32[2]{0}', space=sflag, size = 0x8, scoped, tag = 'scoped memory for tpu_custom_call.1']
    #allocation6 [shape = 'u8[1536]{0}', space=vmem, size = 0x800, scoped, tag = 'input window, operand 2, single buffered']
    #allocation7 [shape = 's32[1]{0}', space=sflag, size = 0x4, scoped, tag = 'scoped memory for tpu_custom_call.1']
    #allocation8 [shape = 'u8[8192]{0}', space=vmem, size = 0x2000, scoped, tag = 'input window, operand 3, single buffered']
    #allocation9 [shape = 'u8[8192]{0}', space=vmem, size = 0x2000, scoped, tag = 'output window, operand 0']
    #allocation10 [shape = 'u8[4096]{0}', space=vmem, size = 0x1000, scoped, tag = 'output window, operand 1']
    #allocation11 [shape = 's32[2]{0}', space=sflag, size = 0x8, scoped, tag = 'scoped memory for tpu_custom_call.1']
    %14 = vsyncpa [#allocation4], 0
    %15 = vsyncpa [#allocation7], 0
    %16 = vsyncpa [#allocation5], 0
    %s17 = scalar_lea.sflag [#allocation5], 1
    %18 = vsyncpa %s17, 0
    %19 = vsyncpa [#allocation11], 0
    %s20 = scalar_lea.sflag [#allocation11], 1
    %21 = vsyncpa %s20, 0
    loop: start=0, step=1, limit=6
    $region2: #{tpu_custom_call.1} parent=1 // loop_pre_header
      _
    $region3: #{tpu_custom_call.1} parent=1 // loop_header
      %s23 = sphi 0, %s27
      %p24 = scmp.ge.s32.totalorder %s23, 6
      %s33 = sphi 0, %s35
      %s36 = sphi 0, %s33
      %s37 = sphi 0, %s36
      %s53 = sphi 0, %s37
      %s57 = sphi 0, %s57
      %s59 = sphi 0, %s57
      %s60 = sphi 0, %s59
      %s74 = sphi 0, %s60
      %s78 = sphi 0, %s78
      %s80 = sphi 0, %s78
      %s81 = sphi 0, %s80
      %s95 = sphi 0, %s81
      %s99 = sphi 0, %s99
      %s101 = sphi 0, %s99
      %s102 = sphi 0, %s101
      %s116 = sphi 0, %s102
      %s120 = sphi 0, %s120
      %s122 = sphi 0, %s120
      %s123 = sphi 0, %s122
      %s137 = sphi 0, %s123
      %s143 = sphi 0, %s145
      %s146 = sphi 0, %s143
      %s147 = sphi 0, %s146
      %s163 = sphi 0, %s147
      %s169 = sphi 0, %s171
      %s172 = sphi 0, %s169
      %s173 = sphi 0, %s172
      %s189 = sphi 0, %s173
      %s195 = sphi 0, %s197
      %s198 = sphi 0, %s195
      %s199 = sphi 0, %s198
      %s215 = sphi 0, %s199
      %s221 = sphi 0, %s223
      %s224 = sphi 0, %s221
      %s225 = sphi 0, %s224
      %s241 = sphi 0, %s225
    $region4: #{tpu_custom_call.1} parent=1 // loop_header_branch
      %26 = sbr.rel (%p24) target = $region8
    $region5: #{tpu_custom_call.1} parent=1 // loop_body
      %s28 = ssub.s32 %s23, 1
      %s29 = ssub.s32 %s23, 2
      %s30 = sadd.s32 %s23, 1
      %s31 = ssub.s32 %s23, %s30
      %p32 = scmp.eq.s32.totalorder %s31, 0
      %s34 = sadd.s32 %s33, 1
      %s35 = scalar_select %p32, %s33, %s34
      %p38 = pneg %p32
      %p39 = scmp.eq.s32.totalorder %s23, 3
      %p40 = por %p38, %p39
      %p41 = scmp.ne.s32.totalorder %s33, %s36
      %p42 = scmp.eq.s32.totalorder %s23, 0
      %p43 = por %p41, %p42
      %p44 = scmp.ne.s32.totalorder %s33, %s36
      %p45 = scmp.eq.s32.totalorder %s28, 3
      %p46 = por %p44, %p45
      %p47 = scmp.ne.s32.totalorder %s36, %s37
      %p48 = scmp.eq.s32.totalorder %s28, 0
      %p49 = por %p47, %p48
      %p50 = scmp.ne.s32.totalorder %s36, %s37
      %p51 = scmp.eq.s32.totalorder %s29, 3
      %p52 = por %p50, %p51
      %p54 = scmp.ne.s32.totalorder %s37, %s53
      %p55 = scmp.eq.s32.totalorder %s29, 0
      %p56 = por %p54, %p55
      %s58 = sadd.s32 %s57, 1
      %p61 = scmp.eq.s32.totalorder %s23, 3
      %p62 = scmp.ne.s32.totalorder %s57, %s59
      %p63 = scmp.eq.s32.totalorder %s23, 0
      %p64 = por %p62, %p63
      %p65 = scmp.ne.s32.totalorder %s57, %s59
      %p66 = scmp.eq.s32.totalorder %s28, 3
      %p67 = por %p65, %p66
      %p68 = scmp.ne.s32.totalorder %s59, %s60
      %p69 = scmp.eq.s32.totalorder %s28, 0
      %p70 = por %p68, %p69
      %p71 = scmp.ne.s32.totalorder %s59, %s60
      %p72 = scmp.eq.s32.totalorder %s29, 3
      %p73 = por %p71, %p72
      %p75 = scmp.ne.s32.totalorder %s60, %s74
      %p76 = scmp.eq.s32.totalorder %s29, 0
      %p77 = por %p75, %p76
      %s79 = sadd.s32 %s78, 1
      %p82 = scmp.eq.s32.totalorder %s23, 3
      %p83 = scmp.ne.s32.totalorder %s78, %s80
      %p84 = scmp.eq.s32.totalorder %s23, 0
      %p85 = por %p83, %p84
      %p86 = scmp.ne.s32.totalorder %s78, %s80
      %p87 = scmp.eq.s32.totalorder %s28, 3
      %p88 = por %p86, %p87
      %p89 = scmp.ne.s32.totalorder %s80, %s81
      %p90 = scmp.eq.s32.totalorder %s28, 0
      %p91 = por %p89, %p90
      %p92 = scmp.ne.s32.totalorder %s80, %s81
      %p93 = scmp.eq.s32.totalorder %s29, 3
      %p94 = por %p92, %p93
      %p96 = scmp.ne.s32.totalorder %s81, %s95
      %p97 = scmp.eq.s32.totalorder %s29, 0
      %p98 = por %p96, %p97
      %s100 = sadd.s32 %s99, 1
      %p103 = scmp.eq.s32.totalorder %s23, 3
      %p104 = scmp.ne.s32.totalorder %s99, %s101
      %p105 = scmp.eq.s32.totalorder %s23, 0
      %p106 = por %p104, %p105
      %p107 = scmp.ne.s32.totalorder %s99, %s101
      %p108 = scmp.eq.s32.totalorder %s28, 3
      %p109 = por %p107, %p108
      %p110 = scmp.ne.s32.totalorder %s101, %s102
      %p111 = scmp.eq.s32.totalorder %s28, 0
      %p112 = por %p110, %p111
      %p113 = scmp.ne.s32.totalorder %s101, %s102
      %p114 = scmp.eq.s32.totalorder %s29, 3
      %p115 = por %p113, %p114
      %p117 = scmp.ne.s32.totalorder %s102, %s116
      %p118 = scmp.eq.s32.totalorder %s29, 0
      %p119 = por %p117, %p118
      %s121 = sadd.s32 %s120, 1
      %p124 = scmp.eq.s32.totalorder %s23, 3
      %p125 = scmp.ne.s32.totalorder %s120, %s122
      %p126 = scmp.eq.s32.totalorder %s23, 0
      %p127 = por %p125, %p126
      %p128 = scmp.ne.s32.totalorder %s120, %s122
      %p129 = scmp.eq.s32.totalorder %s28, 3
      %p130 = por %p128, %p129
      %p131 = scmp.ne.s32.totalorder %s122, %s123
      %p132 = scmp.eq.s32.totalorder %s28, 0
      %p133 = por %p131, %p132
      %p134 = scmp.ne.s32.totalorder %s122, %s123
      %p135 = scmp.eq.s32.totalorder %s29, 3
      %p136 = por %p134, %p135
      %p138 = scmp.ne.s32.totalorder %s123, %s137
      %p139 = scmp.eq.s32.totalorder %s29, 0
      %p140 = por %p138, %p139
      %s141 = ssub.s32 %s23, %s30
      %p142 = scmp.eq.s32.totalorder %s141, 0
      %s144 = sadd.s32 %s143, 1
      %s145 = scalar_select %p142, %s143, %s144
      %p148 = pneg %p142
      %p149 = scmp.eq.s32.totalorder %s23, 3
      %p150 = por %p148, %p149
      %p151 = scmp.ne.s32.totalorder %s143, %s146
      %p152 = scmp.eq.s32.totalorder %s23, 0
      %p153 = por %p151, %p152
      %p154 = scmp.ne.s32.totalorder %s143, %s146
      %p155 = scmp.eq.s32.totalorder %s28, 3
      %p156 = por %p154, %p155
      %p157 = scmp.ne.s32.totalorder %s146, %s147
      %p158 = scmp.eq.s32.totalorder %s28, 0
      %p159 = por %p157, %p158
      %p160 = scmp.ne.s32.totalorder %s146, %s147
      %p161 = scmp.eq.s32.totalorder %s29, 3
      %p162 = por %p160, %p161
      %p164 = scmp.ne.s32.totalorder %s147, %s163
      %p165 = scmp.eq.s32.totalorder %s29, 0
      %p166 = por %p164, %p165
      %s167 = ssub.s32 %s23, %s30
      %p168 = scmp.eq.s32.totalorder %s167, 0
      %s170 = sadd.s32 %s169, 1
      %s171 = scalar_select %p168, %s169, %s170
      %p174 = pneg %p168
      %p175 = scmp.eq.s32.totalorder %s23, 3
      %p176 = por %p174, %p175
      %p177 = scmp.ne.s32.totalorder %s169, %s172
      %p178 = scmp.eq.s32.totalorder %s23, 0
      %p179 = por %p177, %p178
      %p180 = scmp.ne.s32.totalorder %s169, %s172
      %p181 = scmp.eq.s32.totalorder %s28, 3
      %p182 = por %p180, %p181
      %p183 = scmp.ne.s32.totalorder %s172, %s173
      %p184 = scmp.eq.s32.totalorder %s28, 0
      %p185 = por %p183, %p184
      %p186 = scmp.ne.s32.totalorder %s172, %s173
      %p187 = scmp.eq.s32.totalorder %s29, 3
      %p188 = por %p186, %p187
      %p190 = scmp.ne.s32.totalorder %s173, %s189
      %p191 = scmp.eq.s32.totalorder %s29, 0
      %p192 = por %p190, %p191
      %s193 = ssub.s32 %s23, %s30
      %p194 = scmp.eq.s32.totalorder %s193, 0
      %s196 = sadd.s32 %s195, 1
      %s197 = scalar_select %p194, %s195, %s196
      %p200 = pneg %p194
      %p201 = scmp.eq.s32.totalorder %s23, 3
      %p202 = por %p200, %p201
      %p203 = scmp.ne.s32.totalorder %s195, %s198
      %p204 = scmp.eq.s32.totalorder %s23, 0
      %p205 = por %p203, %p204
      %p206 = scmp.ne.s32.totalorder %s195, %s198
      %p207 = scmp.eq.s32.totalorder %s28, 3
      %p208 = por %p206, %p207
      %p209 = scmp.ne.s32.totalorder %s198, %s199
      %p210 = scmp.eq.s32.totalorder %s28, 0
      %p211 = por %p209, %p210
      %p212 = scmp.ne.s32.totalorder %s198, %s199
      %p213 = scmp.eq.s32.totalorder %s29, 3
      %p214 = por %p212, %p213
      %p216 = scmp.ne.s32.totalorder %s199, %s215
      %p217 = scmp.eq.s32.totalorder %s29, 0
      %p218 = por %p216, %p217
      %s219 = ssub.s32 %s23, %s30
      %p220 = scmp.eq.s32.totalorder %s219, 0
      %s222 = sadd.s32 %s221, 1
      %s223 = scalar_select %p220, %s221, %s222
      %p226 = pneg %p220
      %p227 = scmp.eq.s32.totalorder %s23, 3
      %p228 = por %p226, %p227
      %p229 = scmp.ne.s32.totalorder %s221, %s224
      %p230 = scmp.eq.s32.totalorder %s23, 0
      %p231 = por %p229, %p230
      %p232 = scmp.ne.s32.totalorder %s221, %s224
      %p233 = scmp.eq.s32.totalorder %s28, 3
      %p234 = por %p232, %p233
      %p235 = scmp.ne.s32.totalorder %s224, %s225
      %p236 = scmp.eq.s32.totalorder %s28, 0
      %p237 = por %p235, %p236
      %p238 = scmp.ne.s32.totalorder %s224, %s225
      %p239 = scmp.eq.s32.totalorder %s29, 3
      %p240 = por %p238, %p239
      %p242 = scmp.ne.s32.totalorder %s225, %s241
      %p243 = scmp.eq.s32.totalorder %s29, 0
      %p244 = por %p242, %p243
      %p245 = scmp.le.s32.totalorder 1, %s23
      %p246 = scmp.lt.s32.totalorder %s23, 5
      %p247 = pnand %p245, %p246
      %p248 = pneg %p247
      // Predicated region
      $region9: #{tpu_custom_call.1} parent=5 // pred_check
        _
      $region10: #{tpu_custom_call.1} parent=5 // pred_check_branch
        %250 = sbr.rel (%p247) target = $region12
      $region11: #{tpu_custom_call.1} parent=5 // pred_region
        %s251 = ssub.s32 %s23, 1
        // Predicated region
        $region13: #{tpu_custom_call.1} parent=11 // pred_check
          %p252 = pneg %p70
        $region14: #{tpu_custom_call.1} parent=11 // pred_check_branch
          %254 = sbr.rel (%p252) target = $region16
        $region15: #{tpu_custom_call.1} parent=11 // pred_region
          %256 = vsyncadd [#allocation4], 0
          %s257 = sshll.u32 %s1, 4
          %s258 = int_to_ptr.hbm [resolvable:$true] %s257
          %s259 = sshll.u32 [#allocation3], 4
          %s260 = int_to_ptr.vmem [resolvable:$true] %s259
          %265 = dma.hbm_to_vmem [thread:$0]  %s258, 768, %s260, [#allocation4], 64, 64, 4
        $region16: #{tpu_custom_call.1} parent=11 // pred_fallthru
          _
        // Predicated region
        $region17: #{tpu_custom_call.1} parent=11 // pred_check
          %p266 = pneg %p91
        $region18: #{tpu_custom_call.1} parent=11 // pred_check_branch
          %268 = sbr.rel (%p266) target = $region20
        $region19: #{tpu_custom_call.1} parent=11 // pred_region
          %270 = vsyncadd [#allocation7], 0
          %s271 = sshll.u32 %s2, 4
          %s272 = int_to_ptr.hbm [resolvable:$true] %s271
          %s273 = sshll.u32 [#allocation6], 4
          %s274 = int_to_ptr.vmem [resolvable:$true] %s273
          %279 = dma.hbm_to_vmem [thread:$0]  %s272, 48, %s274, [#allocation7], 16, 16, 1
        $region20: #{tpu_custom_call.1} parent=11 // pred_fallthru
          _
        // Predicated region
        $region21: #{tpu_custom_call.1} parent=11 // pred_check
          %p280 = pneg %p112
        $region22: #{tpu_custom_call.1} parent=11 // pred_check_branch
          %282 = sbr.rel (%p280) target = $region24
        $region23: #{tpu_custom_call.1} parent=11 // pred_region
          %284 = vsyncadd [#allocation7], 0
          %s285 = sshll.u32 %s3, 4
          %s286 = int_to_ptr.hbm [resolvable:$true] %s285
          %s287 = sshll.u32 [#allocation8], 4
          %s288 = int_to_ptr.vmem [resolvable:$true] %s287
          %293 = dma.hbm_to_vmem [thread:$0]  %s286, 256, %s288, [#allocation7], 64, 64, 4
        $region24: #{tpu_custom_call.1} parent=11 // pred_fallthru
          _
        // Predicated region
        $region25: #{tpu_custom_call.1} parent=11 // pred_check
          %p294 = pneg %p133
        $region26: #{tpu_custom_call.1} parent=11 // pred_check_branch
          %296 = sbr.rel (%p294) target = $region28
        $region27: #{tpu_custom_call.1} parent=11 // pred_region
          _
        $region28: #{tpu_custom_call.1} parent=11 // pred_fallthru
          _
      $region12: #{tpu_custom_call.1} parent=5 // pred_fallthru
        _
      %p297 = scmp.lt.s32.totalorder %s23, 4
      // Predicated region
      $region29: #{tpu_custom_call.1} parent=5 // pred_check
        %p298 = pneg %p297
      $region30: #{tpu_custom_call.1} parent=5 // pred_check_branch
        %300 = sbr.rel (%p298) target = $region32
      $region31: #{tpu_custom_call.1} parent=5 // pred_region
        // Predicated region
        $region33: #{tpu_custom_call.1} parent=31 // pred_check
          %p301 = pneg %p43
        $region34: #{tpu_custom_call.1} parent=31 // pred_check_branch
          %303 = sbr.rel (%p301) target = $region36
        $region35: #{tpu_custom_call.1} parent=31 // pred_region
          %p304 = scmp.lt.s32.totalorder %s23, 3
          %s305 = scalar_select %p304, %s23, 3
          %s306 = smul.addr %s305, 8
          %s307 = scalar_lea.vmem %s0, %s306
        $region36: #{tpu_custom_call.1} parent=31 // pred_fallthru
          _
        // Predicated region
        $region37: #{tpu_custom_call.1} parent=31 // pred_check
          %p308 = pneg %p153
        $region38: #{tpu_custom_call.1} parent=31 // pred_check_branch
          %310 = sbr.rel (%p308) target = $region40
        $region39: #{tpu_custom_call.1} parent=31 // pred_region
          %p311 = scmp.lt.s32.totalorder %s23, 3
          %s312 = scalar_select %p311, %s23, 3
          %s313 = scalar_lea.vmem %s5, %s312
        $region40: #{tpu_custom_call.1} parent=31 // pred_fallthru
          _
        // Predicated region
        $region41: #{tpu_custom_call.1} parent=31 // pred_check
          %p314 = pneg %p179
        $region42: #{tpu_custom_call.1} parent=31 // pred_check_branch
          %316 = sbr.rel (%p314) target = $region44
        $region43: #{tpu_custom_call.1} parent=31 // pred_region
          %p317 = scmp.lt.s32.totalorder %s23, 3
          %s318 = scalar_select %p317, %s23, 3
          %s319 = smul.addr %s318, 8
          %s320 = scalar_lea.vmem %s6, %s319
        $region44: #{tpu_custom_call.1} parent=31 // pred_fallthru
          _
      $region32: #{tpu_custom_call.1} parent=5 // pred_fallthru
        _
      %p321 = scmp.le.s32.totalorder 1, %s23
      %p322 = scmp.lt.s32.totalorder %s23, 5
      %p323 = pnand %p321, %p322
      %p324 = pneg %p323
      // Predicated region
      $region45: #{tpu_custom_call.1} parent=5 // pred_check
        _
      $region46: #{tpu_custom_call.1} parent=5 // pred_check_branch
        %326 = sbr.rel (%p323) target = $region48
      $region47: #{tpu_custom_call.1} parent=5 // pred_region
        %s327 = ssub.s32 %s23, 1
        // Predicated region
        $region49: #{tpu_custom_call.1} parent=47 // pred_check
          %p328 = pneg %p70
        $region50: #{tpu_custom_call.1} parent=47 // pred_check_branch
          %330 = sbr.rel (%p328) target = $region52
        $region51: #{tpu_custom_call.1} parent=47 // pred_region
          %332 = dma.done [#allocation4], 768
        $region52: #{tpu_custom_call.1} parent=47 // pred_fallthru
          _
        // Predicated region
        $region53: #{tpu_custom_call.1} parent=47 // pred_check
          %p333 = pneg %p91
        $region54: #{tpu_custom_call.1} parent=47 // pred_check_branch
          %335 = sbr.rel (%p333) target = $region56
        $region55: #{tpu_custom_call.1} parent=47 // pred_region
          %337 = dma.done [#allocation7], 48
        $region56: #{tpu_custom_call.1} parent=47 // pred_fallthru
          _
        // Predicated region
        $region57: #{tpu_custom_call.1} parent=47 // pred_check
          %p338 = pneg %p112
        $region58: #{tpu_custom_call.1} parent=47 // pred_check_branch
          %340 = sbr.rel (%p338) target = $region60
        $region59: #{tpu_custom_call.1} parent=47 // pred_region
          %342 = dma.done [#allocation7], 256
        $region60: #{tpu_custom_call.1} parent=47 // pred_fallthru
          _
        %p343 = scmp.lt.s32.totalorder %s28, 3
        %s344 = scalar_select %p343, %s28, 3
        %s345 = smul.addr %s344, 8
        %s346 = scalar_lea.vmem %s0, %s345
        %p347 = pneg %p49
        %p348 = pneg %p46
        %p349 = pneg %p70
        %p350 = pneg %p67
        %p351 = pneg %p91
        %p352 = pneg %p88
        %p353 = pneg %p112
        %p354 = pneg %p109
        %p355 = pneg %p133
        %p356 = pneg %p130
        %p357 = scmp.lt.s32.totalorder %s28, 3
        %s358 = scalar_select %p357, %s28, 3
        %s359 = scalar_lea.vmem %s5, %s358
        %p360 = pneg %p159
        %p361 = pneg %p156
        %p362 = scmp.lt.s32.totalorder %s28, 3
        %s363 = scalar_select %p362, %s28, 3
        %s364 = smul.addr %s363, 8
        %s365 = scalar_lea.vmem %s6, %s364
        %p366 = pneg %p185
        %p367 = pneg %p182
        %p368 = pneg %p211
        %p369 = pneg %p208
        %s370 = sand.u32 %s198, 1
        %s371 = scalar_lea.sflag [#allocation5], %s370
        %s372 = sand.u32 %s198, 1
        %s373 = smul.addr %s372, 8
        %s374 = scalar_lea.vmem [#allocation9], %s373
        %p375 = pneg %p237
        %p376 = pneg %p234
        %s377 = sand.u32 %s224, 1
        %s378 = scalar_lea.sflag [#allocation11], %s377
        %s379 = sand.u32 %s224, 1
        %s380 = smul.addr %s379, 4
        %s381 = scalar_lea.vmem [#allocation10], %s380
        %p382 = scmp.lt.s32.totalorder %s28, 3
        %s383 = scalar_select %p382, %s28, 3
        %s384 = smul.addr %s383, 8
        %s385 = scalar_lea.vmem %s0, %s384
        %p386 = scmp.lt.s32.totalorder %s28, 3
        %s387 = scalar_select %p386, %s28, 3
        %s388 = scalar_lea.vmem %s5, %s387
        %p389 = scmp.lt.s32.totalorder %s28, 3
        %s390 = scalar_select %p389, %s28, 3
        %s391 = smul.addr %s390, 8
        %s392 = scalar_lea.vmem %s6, %s391
        %v394 = vld [vmem:[%s385] sm:$0xff]
        %v395 = vpack.c.bf16 %v394, %v394
        %v396 = vld [vmem:[#allocation3] sm:$0xf]
        %v397 = vld [vmem:[#allocation3 + $0x4] sm:$0xf]
        %v398 = vld [vmem:[#allocation3 + $0x8] sm:$0xf]
        %v399 = vld [vmem:[#allocation3 + $0xc] sm:$0xf]
        %v400 = vld [vmem:[#allocation6] sm:$0x1]
        %v402 = vperm.slane %v400, 0
        %v408 = vunpack.c.l.b16 %v396
        %v409 = vunpack.c.l.b16 %v397
        %v410 = vunpack.c.l.b16 %v398
        %v411 = vunpack.c.l.b16 %v399
        %v412 = vpack.c.b16 %v409, %v408
        %v413 = vpack.c.b16 %v411, %v410
        %vm416 = vcmask 261120
        %v418 = vsel %vm416, %v395, 0
        %420 = vmatpush.bf16.msra.mxu0 0
        %421 = vmatpush.bf16.msra.mxu0 0
        %422 = vmatpush.bf16.msra.mxu0 0
        %423 = vmatpush.bf16.msra.mxu0 0
        %424 = vmatpush.bf16.msra.mxu0 0
        %425 = vmatpush.bf16.msra.mxu0 0
        %426 = vmatpush.bf16.msra.mxu0 %v413
        %427 = vmatpush.bf16.msra.mxu0 %v412
        %428 = vmatmul.bf16.gmra.mxu0 %v418
        %v429 = vpop.f32.mrf.mxu0
        %v430 = vadd.f32 %v402, %v429
        %v431 = vpop.f32.mrf.mxu0
        %432 = vdwg.mxu0
        %v433 = vpack.c.bf16 %v430, %v430
        %vm434 = vcmask 257024
        %435 = vst.msk [vmem:[#allocation2] sm:$0xf] %vm434, %v433
        %s436 = scalar_lea.vmem [#allocation3], 16
        %v437 = vld [vmem:[%s436] sm:$0xf]
        %v438 = vld [vmem:[%s436 + $0x4] sm:$0xf]
        %v439 = vld [vmem:[%s436 + $0x8] sm:$0xf]
        %v440 = vld [vmem:[%s436 + $0xc] sm:$0xf]
        %s441 = scalar_lea.vmem [#allocation6], 1
        %v442 = vld [vmem:[%s441] sm:$0x1]
        %v444 = vperm.slane %v442, 0
        %v450 = vunpack.c.l.b16 %v437
        %v451 = vunpack.c.l.b16 %v438
        %v452 = vunpack.c.l.b16 %v439
        %v453 = vunpack.c.l.b16 %v440
        %v454 = vpack.c.b16 %v451, %v450
        %v455 = vpack.c.b16 %v453, %v452
        %458 = vmatpush.bf16.msra.mxu0 0
        %459 = vmatpush.bf16.msra.mxu0 0
        %460 = vmatpush.bf16.msra.mxu0 0
        %461 = vmatpush.bf16.msra.mxu0 0
        %462 = vmatpush.bf16.msra.mxu0 0
        %463 = vmatpush.bf16.msra.mxu0 0
        %464 = vmatpush.bf16.msra.mxu0 %v455
        %465 = vmatpush.bf16.msra.mxu0 %v454
        %466 = vmatmul.bf16.gmra.mxu0 %v418
        %v467 = vpop.f32.mrf.mxu0
        %v468 = vadd.f32 %v444, %v467
        %v469 = vpop.f32.mrf.mxu0
        %470 = vdwg.mxu0
        %v471 = vpack.c.bf16 %v468, %v468
        %s472 = scalar_lea.vmem [#allocation2], 4
        %473 = vst.msk [vmem:[%s472] sm:$0xf] %vm434, %v471
        %s474 = scalar_lea.vmem [#allocation3], 32
        %v475 = vld [vmem:[%s474] sm:$0xf]
        %v476 = vld [vmem:[%s474 + $0x4] sm:$0xf]
        %v477 = vld [vmem:[%s474 + $0x8] sm:$0xf]
        %v478 = vld [vmem:[%s474 + $0xc] sm:$0xf]
        %s479 = scalar_lea.vmem [#allocation6], 2
        %v480 = vld [vmem:[%s479] sm:$0x1]
        %v482 = vperm.slane %v480, 0
        %v488 = vunpack.c.l.b16 %v475
        %v489 = vunpack.c.l.b16 %v476
        %v490 = vunpack.c.l.b16 %v477
        %v491 = vunpack.c.l.b16 %v478
        %v492 = vpack.c.b16 %v489, %v488
        %v493 = vpack.c.b16 %v491, %v490
        %496 = vmatpush.bf16.msra.mxu0 0
        %497 = vmatpush.bf16.msra.mxu0 0
        %498 = vmatpush.bf16.msra.mxu0 0
        %499 = vmatpush.bf16.msra.mxu0 0
        %500 = vmatpush.bf16.msra.mxu0 0
        %501 = vmatpush.bf16.msra.mxu0 0
        %502 = vmatpush.bf16.msra.mxu0 %v493
        %503 = vmatpush.bf16.msra.mxu0 %v492
        %504 = vmatmul.bf16.gmra.mxu0 %v418
        %v505 = vpop.f32.mrf.mxu0
        %v506 = vadd.f32 %v482, %v505
        %v507 = vpop.f32.mrf.mxu0
        %508 = vdwg.mxu0
        %v509 = vpack.c.bf16 %v506, %v506
        %s510 = scalar_lea.vmem [#allocation2], 8
        %511 = vst.msk [vmem:[%s510] sm:$0xf] %vm434, %v509
        %v512 = vld [vmem:[#allocation2] sm:$0xf]
        %v513 = vld [vmem:[%s472] sm:$0xf]
        %v514 = vld [vmem:[%s510] sm:$0xf]
        %v515 = vld [vmem:[%s388] sm:$0x1]
        %v517 = vperm.slane %v515, 0
        %v520 = vsel %vm416, %v512, 0
        %v523 = vsel %vm416, %v513, 0
        %525 = vmatpush.bf16.xpose.msra.mxu0 0
        %526 = vmatpush.bf16.xpose.msra.mxu0 0
        %527 = vmatpush.bf16.xpose.msra.mxu0 0
        %528 = vmatpush.bf16.xpose.msra.mxu0 0
        %529 = vmatpush.bf16.xpose.msra.mxu0 0
        %530 = vmatpush.bf16.xpose.msra.mxu0 0
        %531 = vmatpush.bf16.xpose.msra.mxu0 0
        %532 = vmatpush.bf16.xpose.msra.mxu0 %v523
        %533 = vmatmul.bf16.gmra.mxu0 %v520
        %v534 = vpop.f32.mrf.mxu0
        %v535 = vadd.f32 %v517, %v534
        %v536 = vpop.f32.mrf.mxu0
        %537 = vdwg.mxu0
        %vm538 = vcmask 64512
        %v539 = vsel %vm538, %v535, -inf
        %540 = vmax.xlane.f32.xlu0 %v539
        %v541 = vpop.xlane.xlu0 %540
        %v542 = vsub.f32 %v535, %v541
        %v543 = vmul.f32 %v542, 1.442695
        %v544 = vpow.pop %v543
        %v545 = vsel %vm538, %v544, 0.0
        %546 = vadd.xlane.f32.xlu0 %v545
        %v547 = vpop.xlane.xlu0 %546
        %v548 = vrcp.pop %v547
        %v549 = vmul.f32 %v547, %v548
        %v550 = vsub.f32 1.0, %v549
        %v551 = vmul.f32 %v548, %v550
        %v552 = vadd.f32 %v548, %v551
        %vm553 = vweird.f32 %v547
        %vm554 = vweird.f32 %v548
        %vm555 = vmor %vm553, %vm554
        %v556 = vsel %vm555, %v548, %v552
        %v557 = vand.u32 2147483647, %v547
        %vm558 = vcmp.eq.f32.partialorder %v557, 8.507059e+37
        %v559 = vand.u32 %v547, 2147483648
        %v560 = vor.u32 1.1754944e-38, %v559
        %v561 = vsel %vm558, %v560, %v556
        %v562 = vmul.f32 %v544, %v561
        %v563 = vpack.c.bf16 %v562, %v562
        %vm564 = vcmask 60416
        %565 = vst.msk [vmem:[%s381] sm:$0xf] %vm564, %v563
        %v566 = vrcp.pop %v547
        %v567 = vmul.f32 %v544, %v566
        %v568 = vpack.c.bf16 %v567, %v567
        %v570 = vsel %vm538, %v568, 0
        %vm572 = vcmask 1043456
        %v574 = vsel %vm572, %v514, 0
        %576 = vmatpush.bf16.msra.mxu0 0
        %577 = vmatpush.bf16.msra.mxu0 0
        %578 = vmatpush.bf16.msra.mxu0 0
        %579 = vmatpush.bf16.msra.mxu0 0
        %580 = vmatpush.bf16.msra.mxu0 0
        %581 = vmatpush.bf16.msra.mxu0 0
        %582 = vmatpush.bf16.msra.mxu0 0
        %583 = vmatpush.bf16.msra.mxu0 %v574
        %584 = vmatmul.bf16.gmra.mxu0 %v570
        %v585 = vpop.f32.mrf.mxu0
        %v586 = vadd.f32 0.0, %v585
        %v587 = vpop.f32.mrf.mxu0
        %588 = vdwg.mxu0
        %v589 = vpack.c.bf16 %v586, %v586
        %v590 = vld [vmem:[#allocation8] sm:$0xf]
        %v591 = vld [vmem:[#allocation8 + $0x4] sm:$0xf]
        %v592 = vld [vmem:[#allocation8 + $0x8] sm:$0xf]
        %v593 = vld [vmem:[#allocation8 + $0xc] sm:$0xf]
        %v594 = vld [vmem:[%s4] sm:$0x1]
        %v596 = vperm.slane %v594, 0
        %v602 = vunpack.c.l.b16 %v590
        %v603 = vunpack.c.l.b16 %v591
        %v604 = vunpack.c.l.b16 %v592
        %v605 = vunpack.c.l.b16 %v593
        %v606 = vpack.c.b16 %v603, %v602
        %v607 = vpack.c.b16 %v605, %v604
        %v611 = vsel %vm416, %v589, 0
        %613 = vmatpush.bf16.msra.mxu0 0
        %614 = vmatpush.bf16.msra.mxu0 0
        %615 = vmatpush.bf16.msra.mxu0 0
        %616 = vmatpush.bf16.msra.mxu0 0
        %617 = vmatpush.bf16.msra.mxu0 0
        %618 = vmatpush.bf16.msra.mxu0 0
        %619 = vmatpush.bf16.msra.mxu0 %v607
        %620 = vmatpush.bf16.msra.mxu0 %v606
        %621 = vmatmul.bf16.gmra.mxu0 %v611
        %v622 = vpop.f32.mrf.mxu0
        %v623 = vadd.f32 %v596, %v622
        %v624 = vpop.f32.mrf.mxu0
        %625 = vdwg.mxu0
        %v626 = vld [vmem:[%s392] sm:$0xff]
        %628 = vset.pattern.permute.xlu0 0
        %629 = vperm.xlu0 %628, %v626
        %v630 = vpop.permute.xlu0 %629
        %v632 = vmul.f32 %v623, %v630
        %633 = vst.msk [vmem:[%s374] sm:$0xff] %vm416, %v632
        %s634 = sand.u32 %s198, 1
        %s635 = scalar_lea.sflag [#allocation5], %s634
        %s636 = sand.u32 %s198, 1
        %s637 = smul.addr %s636, 8
        %s638 = scalar_lea.vmem [#allocation9], %s637
        %s639 = sand.u32 %s224, 1
        %s640 = scalar_lea.sflag [#allocation11], %s639
        %s641 = sand.u32 %s224, 1
        %s642 = smul.addr %s641, 4
        %s643 = scalar_lea.vmem [#allocation10], %s642
        // Predicated region
        $region61: #{tpu_custom_call.1} parent=47 // pred_check
          %p644 = pneg %p208
        $region62: #{tpu_custom_call.1} parent=47 // pred_check_branch
          %646 = sbr.rel (%p644) target = $region64
        $region63: #{tpu_custom_call.1} parent=47 // pred_region
          %648 = vsyncadd %s635, 0
          %s649 = smul.addr %s28, 8
          %s650 = scalar_lea.hbm %s7, %s649
          %s652 = sshll.u32 %s638, 4
          %s653 = int_to_ptr.vmem [resolvable:$true] %s652
          %s654 = sshll.u32 %s650, 4
          %s655 = int_to_ptr.hbm [resolvable:$true] %s654
          %657 = dma.vmem_to_hbm [thread:$0]  %s653, 128, %s655, %s635
        $region64: #{tpu_custom_call.1} parent=47 // pred_fallthru
          _
        // Predicated region
        $region65: #{tpu_custom_call.1} parent=47 // pred_check
          %p658 = pneg %p234
        $region66: #{tpu_custom_call.1} parent=47 // pred_check_branch
          %660 = sbr.rel (%p658) target = $region68
        $region67: #{tpu_custom_call.1} parent=47 // pred_region
          %662 = vsyncadd %s640, 0
          %s663 = smul.addr %s28, 4
          %s664 = scalar_lea.hbm %s8, %s663
          %s666 = sshll.u32 %s643, 4
          %s667 = int_to_ptr.vmem [resolvable:$true] %s666
          %s668 = sshll.u32 %s664, 4
          %s669 = int_to_ptr.hbm [resolvable:$true] %s668
          %671 = dma.vmem_to_hbm [thread:$0]  %s667, 64, %s669, %s640
        $region68: #{tpu_custom_call.1} parent=47 // pred_fallthru
          _
      $region48: #{tpu_custom_call.1} parent=5 // pred_fallthru
        _
      %p672 = scmp.le.s32.totalorder 2, %s23
      // Predicated region
      $region69: #{tpu_custom_call.1} parent=5 // pred_check
        %p673 = pneg %p672
      $region70: #{tpu_custom_call.1} parent=5 // pred_check_branch
        %675 = sbr.rel (%p673) target = $region72
      $region71: #{tpu_custom_call.1} parent=5 // pred_region
        %s676 = ssub.s32 %s23, 2
        // Predicated region
        $region73: #{tpu_custom_call.1} parent=71 // pred_check
          %p677 = pneg %p214
        $region74: #{tpu_custom_call.1} parent=71 // pred_check_branch
          %679 = sbr.rel (%p677) target = $region76
        $region75: #{tpu_custom_call.1} parent=71 // pred_region
          %s680 = sand.u32 %s199, 1
          %s681 = scalar_lea.sflag [#allocation5], %s680
          %s682 = sand.u32 %s199, 1
          %s683 = smul.addr %s682, 8
          %s684 = scalar_lea.vmem [#allocation9], %s683
          %686 = dma.done %s681, 128
        $region76: #{tpu_custom_call.1} parent=71 // pred_fallthru
          _
        // Predicated region
        $region77: #{tpu_custom_call.1} parent=71 // pred_check
          %p687 = pneg %p240
        $region78: #{tpu_custom_call.1} parent=71 // pred_check_branch
          %689 = sbr.rel (%p687) target = $region80
        $region79: #{tpu_custom_call.1} parent=71 // pred_region
          %s690 = sand.u32 %s225, 1
          %s691 = scalar_lea.sflag [#allocation11], %s690
          %s692 = sand.u32 %s225, 1
          %s693 = smul.addr %s692, 4
          %s694 = scalar_lea.vmem [#allocation10], %s693
          %696 = dma.done %s691, 64
        $region80: #{tpu_custom_call.1} parent=71 // pred_fallthru
          _
      $region72: #{tpu_custom_call.1} parent=5 // pred_fallthru
        _
    $region6: #{tpu_custom_call.1} parent=1 // loop_footer
      %s27 = sadd.s32 1, %s23
    $region7: #{tpu_custom_call.1} parent=1 // loop_footer_branch
      %22 = sbr.rel target = $region3
    $region8: #{tpu_custom_call.1} parent=1 // loop_exit
      _
    %697 = vsyncpa [#allocation4], 1
    %s698 = scalar_lea.sflag [#allocation4], 1
    %699 = vsyncpa %s698, 1
    %700 = vsyncpa [#allocation7], 1
    %701 = vsyncpa [#allocation5], 1
    %s702 = scalar_lea.sflag [#allocation5], 1
    %703 = vsyncpa %s702, 1
    %704 = vsyncpa [#allocation11], 1
    %s705 = scalar_lea.sflag [#allocation11], 1
    %706 = vsyncpa %s705, 1

// kernel: tpu_custom_call.1
$region0: #{tpu_custom_call.1}
  #allocation0 [shape = 'u32[]', space=smem, size = 0x4, offset = 0x4, fixed_abs, tag = 'smem constant byte address 0x4 - core index']
  #allocation1 [shape = 'u32[72,128]{1,0:T(1,128)}', space=vmem, size = 0x9000, scoped, tag = 'internal scratch']
  #allocation2 [shape = 'bf16[3,8,32]{2,1,0:T(8,128)(2,1)}', space=vmem, size = 0x1800, scoped, tag = 'scratch operand']
  %s0 = inlined_call_operand.vmem [shape: f32[4,8,32], index: 0, kind: input, shape index: {}]
  %s1 = inlined_call_operand.hbm [shape: bf16[3,32,32], index: 1, kind: input, shape index: {}]
  %s2 = inlined_call_operand.hbm [shape: f32[3,1,32], index: 2, kind: input, shape index: {}]
  %s3 = inlined_call_operand.hbm [shape: bf16[32,32], index: 3, kind: input, shape index: {}]
  %s4 = inlined_call_operand.vmem [shape: f32[1,32], index: 4, kind: input, shape index: {}]
  %s5 = inlined_call_operand.vmem [shape: f32[4,1,8], index: 5, kind: input, shape index: {}]
  %s6 = inlined_call_operand.vmem [shape: f32[4,8,1], index: 6, kind: input, shape index: {}]
  %s7 = inlined_call_operand.hbm [shape: f32[4,8,32], index: 7, kind: output, shape index: {0}]
  %s8 = inlined_call_operand.hbm [shape: bf16[4,8,8], index: 8, kind: output, shape index: {1}]
  %9 = xla_tuple %s7, %s8
  %s10 = sld [smem:[#allocation0]]
  $region81: #{tpu_custom_call.1} parent=0
    _
  %s12 = ssub.s32 1, %s10
  %s13 = scalar_select 0, %s12, %s10
  $region1: #{tpu_custom_call.1} parent=0
    #allocation3 [shape = 'u8[24576]{0}', space=vmem, size = 0x6000, scoped, tag = 'input window, operand 1, single buffered']
    #allocation4 [shape = 's32[2]{0}', space=sflag, size = 0x8, scoped, tag = 'scoped memory for tpu_custom_call.1']
    #allocation5 [shape = 's32[2]{0}', space=sflag, size = 0x8, scoped, tag = 'scoped memory for tpu_custom_call.1']
    #allocation6 [shape = 'u8[1536]{0}', space=vmem, size = 0x800, scoped, tag = 'input window, operand 2, single buffered']
    #allocation7 [shape = 's32[1]{0}', space=sflag, size = 0x4, scoped, tag = 'scoped memory for tpu_custom_call.1']
    #allocation8 [shape = 'u8[8192]{0}', space=vmem, size = 0x2000, scoped, tag = 'input window, operand 3, single buffered']
    #allocation9 [shape = 'u8[8192]{0}', space=vmem, size = 0x2000, scoped, tag = 'output window, operand 0']
    #allocation10 [shape = 'u8[4096]{0}', space=vmem, size = 0x1000, scoped, tag = 'output window, operand 1']
    #allocation11 [shape = 's32[2]{0}', space=sflag, size = 0x8, scoped, tag = 'scoped memory for tpu_custom_call.1']
    %14 = vsyncpa [#allocation4], 0
    %15 = vsyncpa [#allocation7], 0
    %16 = vsyncpa [#allocation5], 0
    %s17 = scalar_lea.sflag [#allocation5], 1
    %18 = vsyncpa %s17, 0
    %19 = vsyncpa [#allocation11], 0
    %s20 = scalar_lea.sflag [#allocation11], 1
    %21 = vsyncpa %s20, 0
    loop: start=0, step=1, limit=6
    $region2: #{tpu_custom_call.1} parent=1 // loop_pre_header
      _
    $region3: #{tpu_custom_call.1} parent=1 // loop_header
      %s23 = sphi 0, %s27
      %p24 = scmp.ge.s32.totalorder %s23, 6
      %s33 = sphi 0, %s35
      %s36 = sphi 0, %s33
      %s37 = sphi 0, %s36
      %s53 = sphi 0, %s37
      %s57 = sphi 0, %s57
      %s59 = sphi 0, %s57
      %s60 = sphi 0, %s59
      %s74 = sphi 0, %s60
      %s78 = sphi 0, %s78
      %s80 = sphi 0, %s78
      %s81 = sphi 0, %s80
      %s95 = sphi 0, %s81
      %s99 = sphi 0, %s99
      %s101 = sphi 0, %s99
      %s102 = sphi 0, %s101
      %s116 = sphi 0, %s102
      %s120 = sphi 0, %s120
      %s122 = sphi 0, %s120
      %s123 = sphi 0, %s122
      %s137 = sphi 0, %s123
      %s143 = sphi 0, %s145
      %s146 = sphi 0, %s143
      %s147 = sphi 0, %s146
      %s163 = sphi 0, %s147
      %s169 = sphi 0, %s171
      %s172 = sphi 0, %s169
      %s173 = sphi 0, %s172
      %s189 = sphi 0, %s173
      %s195 = sphi 0, %s197
      %s198 = sphi 0, %s195
      %s199 = sphi 0, %s198
      %s215 = sphi 0, %s199
      %s221 = sphi 0, %s223
      %s224 = sphi 0, %s221
      %s225 = sphi 0, %s224
      %s241 = sphi 0, %s225
    $region4: #{tpu_custom_call.1} parent=1 // loop_header_branch
      %26 = sbr.rel (%p24) target = $region8
    $region5: #{tpu_custom_call.1} parent=1 // loop_body
      %s28 = ssub.s32 %s23, 1
      %s29 = ssub.s32 %s23, 2
      %s30 = sadd.s32 %s23, 1
      %s31 = ssub.s32 %s23, %s30
      %p32 = scmp.eq.s32.totalorder %s31, 0
      %s34 = sadd.s32 %s33, 1
      %s35 = scalar_select %p32, %s33, %s34
      %p38 = pneg %p32
      %p39 = scmp.eq.s32.totalorder %s23, 3
      %p40 = por %p38, %p39
      %p41 = scmp.ne.s32.totalorder %s33, %s36
      %p42 = scmp.eq.s32.totalorder %s23, 0
      %p43 = por %p41, %p42
      %p44 = scmp.ne.s32.totalorder %s33, %s36
      %p45 = scmp.eq.s32.totalorder %s28, 3
      %p46 = por %p44, %p45
      %p47 = scmp.ne.s32.totalorder %s36, %s37
      %p48 = scmp.eq.s32.totalorder %s28, 0
      %p49 = por %p47, %p48
      %p50 = scmp.ne.s32.totalorder %s36, %s37
      %p51 = scmp.eq.s32.totalorder %s29, 3
      %p52 = por %p50, %p51
      %p54 = scmp.ne.s32.totalorder %s37, %s53
      %p55 = scmp.eq.s32.totalorder %s29, 0
      %p56 = por %p54, %p55
      %s58 = sadd.s32 %s57, 1
      %p61 = scmp.eq.s32.totalorder %s23, 3
      %p62 = scmp.ne.s32.totalorder %s57, %s59
      %p63 = scmp.eq.s32.totalorder %s23, 0
      %p64 = por %p62, %p63
      %p65 = scmp.ne.s32.totalorder %s57, %s59
      %p66 = scmp.eq.s32.totalorder %s28, 3
      %p67 = por %p65, %p66
      %p68 = scmp.ne.s32.totalorder %s59, %s60
      %p69 = scmp.eq.s32.totalorder %s28, 0
      %p70 = por %p68, %p69
      %p71 = scmp.ne.s32.totalorder %s59, %s60
      %p72 = scmp.eq.s32.totalorder %s29, 3
      %p73 = por %p71, %p72
      %p75 = scmp.ne.s32.totalorder %s60, %s74
      %p76 = scmp.eq.s32.totalorder %s29, 0
      %p77 = por %p75, %p76
      %s79 = sadd.s32 %s78, 1
      %p82 = scmp.eq.s32.totalorder %s23, 3
      %p83 = scmp.ne.s32.totalorder %s78, %s80
      %p84 = scmp.eq.s32.totalorder %s23, 0
      %p85 = por %p83, %p84
      %p86 = scmp.ne.s32.totalorder %s78, %s80
      %p87 = scmp.eq.s32.totalorder %s28, 3
      %p88 = por %p86, %p87
      %p89 = scmp.ne.s32.totalorder %s80, %s81
      %p90 = scmp.eq.s32.totalorder %s28, 0
      %p91 = por %p89, %p90
      %p92 = scmp.ne.s32.totalorder %s80, %s81
      %p93 = scmp.eq.s32.totalorder %s29, 3
      %p94 = por %p92, %p93
      %p96 = scmp.ne.s32.totalorder %s81, %s95
      %p97 = scmp.eq.s32.totalorder %s29, 0
      %p98 = por %p96, %p97
      %s100 = sadd.s32 %s99, 1
      %p103 = scmp.eq.s32.totalorder %s23, 3
      %p104 = scmp.ne.s32.totalorder %s99, %s101
      %p105 = scmp.eq.s32.totalorder %s23, 0
      %p106 = por %p104, %p105
      %p107 = scmp.ne.s32.totalorder %s99, %s101
      %p108 = scmp.eq.s32.totalorder %s28, 3
      %p109 = por %p107, %p108
      %p110 = scmp.ne.s32.totalorder %s101, %s102
      %p111 = scmp.eq.s32.totalorder %s28, 0
      %p112 = por %p110, %p111
      %p113 = scmp.ne.s32.totalorder %s101, %s102
      %p114 = scmp.eq.s32.totalorder %s29, 3
      %p115 = por %p113, %p114
      %p117 = scmp.ne.s32.totalorder %s102, %s116
      %p118 = scmp.eq.s32.totalorder %s29, 0
      %p119 = por %p117, %p118
      %s121 = sadd.s32 %s120, 1
      %p124 = scmp.eq.s32.totalorder %s23, 3
      %p125 = scmp.ne.s32.totalorder %s120, %s122
      %p126 = scmp.eq.s32.totalorder %s23, 0
      %p127 = por %p125, %p126
      %p128 = scmp.ne.s32.totalorder %s120, %s122
      %p129 = scmp.eq.s32.totalorder %s28, 3
      %p130 = por %p128, %p129
      %p131 = scmp.ne.s32.totalorder %s122, %s123
      %p132 = scmp.eq.s32.totalorder %s28, 0
      %p133 = por %p131, %p132
      %p134 = scmp.ne.s32.totalorder %s122, %s123
      %p135 = scmp.eq.s32.totalorder %s29, 3
      %p136 = por %p134, %p135
      %p138 = scmp.ne.s32.totalorder %s123, %s137
      %p139 = scmp.eq.s32.totalorder %s29, 0
      %p140 = por %p138, %p139
      %s141 = ssub.s32 %s23, %s30
      %p142 = scmp.eq.s32.totalorder %s141, 0
      %s144 = sadd.s32 %s143, 1
      %s145 = scalar_select %p142, %s143, %s144
      %p148 = pneg %p142
      %p149 = scmp.eq.s32.totalorder %s23, 3
      %p150 = por %p148, %p149
      %p151 = scmp.ne.s32.totalorder %s143, %s146
      %p152 = scmp.eq.s32.totalorder %s23, 0
      %p153 = por %p151, %p152
      %p154 = scmp.ne.s32.totalorder %s143, %s146
      %p155 = scmp.eq.s32.totalorder %s28, 3
      %p156 = por %p154, %p155
      %p157 = scmp.ne.s32.totalorder %s146, %s147
      %p158 = scmp.eq.s32.totalorder %s28, 0
      %p159 = por %p157, %p158
      %p160 = scmp.ne.s32.totalorder %s146, %s147
      %p161 = scmp.eq.s32.totalorder %s29, 3
      %p162 = por %p160, %p161
      %p164 = scmp.ne.s32.totalorder %s147, %s163
      %p165 = scmp.eq.s32.totalorder %s29, 0
      %p166 = por %p164, %p165
      %s167 = ssub.s32 %s23, %s30
      %p168 = scmp.eq.s32.totalorder %s167, 0
      %s170 = sadd.s32 %s169, 1
      %s171 = scalar_select %p168, %s169, %s170
      %p174 = pneg %p168
      %p175 = scmp.eq.s32.totalorder %s23, 3
      %p176 = por %p174, %p175
      %p177 = scmp.ne.s32.totalorder %s169, %s172
      %p178 = scmp.eq.s32.totalorder %s23, 0
      %p179 = por %p177, %p178
      %p180 = scmp.ne.s32.totalorder %s169, %s172
      %p181 = scmp.eq.s32.totalorder %s28, 3
      %p182 = por %p180, %p181
      %p183 = scmp.ne.s32.totalorder %s172, %s173
      %p184 = scmp.eq.s32.totalorder %s28, 0
      %p185 = por %p183, %p184
      %p186 = scmp.ne.s32.totalorder %s172, %s173
      %p187 = scmp.eq.s32.totalorder %s29, 3
      %p188 = por %p186, %p187
      %p190 = scmp.ne.s32.totalorder %s173, %s189
      %p191 = scmp.eq.s32.totalorder %s29, 0
      %p192 = por %p190, %p191
      %s193 = ssub.s32 %s23, %s30
      %p194 = scmp.eq.s32.totalorder %s193, 0
      %s196 = sadd.s32 %s195, 1
      %s197 = scalar_select %p194, %s195, %s196
      %p200 = pneg %p194
      %p201 = scmp.eq.s32.totalorder %s23, 3
      %p202 = por %p200, %p201
      %p203 = scmp.ne.s32.totalorder %s195, %s198
      %p204 = scmp.eq.s32.totalorder %s23, 0
      %p205 = por %p203, %p204
      %p206 = scmp.ne.s32.totalorder %s195, %s198
      %p207 = scmp.eq.s32.totalorder %s28, 3
      %p208 = por %p206, %p207
      %p209 = scmp.ne.s32.totalorder %s198, %s199
      %p210 = scmp.eq.s32.totalorder %s28, 0
      %p211 = por %p209, %p210
      %p212 = scmp.ne.s32.totalorder %s198, %s199
      %p213 = scmp.eq.s32.totalorder %s29, 3
      %p214 = por %p212, %p213
      %p216 = scmp.ne.s32.totalorder %s199, %s215
      %p217 = scmp.eq.s32.totalorder %s29, 0
      %p218 = por %p216, %p217
      %s219 = ssub.s32 %s23, %s30
      %p220 = scmp.eq.s32.totalorder %s219, 0
      %s222 = sadd.s32 %s221, 1
      %s223 = scalar_select %p220, %s221, %s222
      %p226 = pneg %p220
      %p227 = scmp.eq.s32.totalorder %s23, 3
      %p228 = por %p226, %p227
      %p229 = scmp.ne.s32.totalorder %s221, %s224
      %p230 = scmp.eq.s32.totalorder %s23, 0
      %p231 = por %p229, %p230
      %p232 = scmp.ne.s32.totalorder %s221, %s224
      %p233 = scmp.eq.s32.totalorder %s28, 3
      %p234 = por %p232, %p233
      %p235 = scmp.ne.s32.totalorder %s224, %s225
      %p236 = scmp.eq.s32.totalorder %s28, 0
      %p237 = por %p235, %p236
      %p238 = scmp.ne.s32.totalorder %s224, %s225
      %p239 = scmp.eq.s32.totalorder %s29, 3
      %p240 = por %p238, %p239
      %p242 = scmp.ne.s32.totalorder %s225, %s241
      %p243 = scmp.eq.s32.totalorder %s29, 0
      %p244 = por %p242, %p243
      %p245 = scmp.le.s32.totalorder 1, %s23
      %p246 = scmp.lt.s32.totalorder %s23, 5
      %p247 = pnand %p245, %p246
      %p248 = pneg %p247
      // Predicated region
      $region9: #{tpu_custom_call.1} parent=5 // pred_check
        _
      $region10: #{tpu_custom_call.1} parent=5 // pred_check_branch
        %250 = sbr.rel (%p247) target = $region12
      $region11: #{tpu_custom_call.1} parent=5 // pred_region
        %s251 = ssub.s32 %s23, 1
        // Predicated region
        $region13: #{tpu_custom_call.1} parent=11 // pred_check
          %p252 = pneg %p70
        $region14: #{tpu_custom_call.1} parent=11 // pred_check_branch
          %254 = sbr.rel (%p252) target = $region16
        $region15: #{tpu_custom_call.1} parent=11 // pred_region
          %256 = vsyncadd [#allocation4], 0
          %s257 = sshll.u32 %s1, 4
          %s258 = int_to_ptr.hbm [resolvable:$true] %s257
          %s259 = sshll.u32 [#allocation3], 4
          %s260 = int_to_ptr.vmem [resolvable:$true] %s259
          %265 = dma.hbm_to_vmem [thread:$0]  %s258, 768, %s260, [#allocation4], 64, 64, 4
        $region16: #{tpu_custom_call.1} parent=11 // pred_fallthru
          _
        // Predicated region
        $region17: #{tpu_custom_call.1} parent=11 // pred_check
          %p266 = pneg %p91
        $region18: #{tpu_custom_call.1} parent=11 // pred_check_branch
          %268 = sbr.rel (%p266) target = $region20
        $region19: #{tpu_custom_call.1} parent=11 // pred_region
          %270 = vsyncadd [#allocation7], 0
          %s271 = sshll.u32 %s2, 4
          %s272 = int_to_ptr.hbm [resolvable:$true] %s271
          %s273 = sshll.u32 [#allocation6], 4
          %s274 = int_to_ptr.vmem [resolvable:$true] %s273
          %279 = dma.hbm_to_vmem [thread:$0]  %s272, 48, %s274, [#allocation7], 16, 16, 1
        $region20: #{tpu_custom_call.1} parent=11 // pred_fallthru
          _
        // Predicated region
        $region21: #{tpu_custom_call.1} parent=11 // pred_check
          %p280 = pneg %p112
        $region22: #{tpu_custom_call.1} parent=11 // pred_check_branch
          %282 = sbr.rel (%p280) target = $region24
        $region23: #{tpu_custom_call.1} parent=11 // pred_region
          %284 = vsyncadd [#allocation7], 0
          %s285 = sshll.u32 %s3, 4
          %s286 = int_to_ptr.hbm [resolvable:$true] %s285
          %s287 = sshll.u32 [#allocation8], 4
          %s288 = int_to_ptr.vmem [resolvable:$true] %s287
          %293 = dma.hbm_to_vmem [thread:$0]  %s286, 256, %s288, [#allocation7], 64, 64, 4
        $region24: #{tpu_custom_call.1} parent=11 // pred_fallthru
          _
        // Predicated region
        $region25: #{tpu_custom_call.1} parent=11 // pred_check
          %p294 = pneg %p133
        $region26: #{tpu_custom_call.1} parent=11 // pred_check_branch
          %296 = sbr.rel (%p294) target = $region28
        $region27: #{tpu_custom_call.1} parent=11 // pred_region
          _
        $region28: #{tpu_custom_call.1} parent=11 // pred_fallthru
          _
      $region12: #{tpu_custom_call.1} parent=5 // pred_fallthru
        _
      %p297 = scmp.lt.s32.totalorder %s23, 4
      // Predicated region
      $region29: #{tpu_custom_call.1} parent=5 // pred_check
        %p298 = pneg %p297
      $region30: #{tpu_custom_call.1} parent=5 // pred_check_branch
        %300 = sbr.rel (%p298) target = $region32
      $region31: #{tpu_custom_call.1} parent=5 // pred_region
        // Predicated region
        $region33: #{tpu_custom_call.1} parent=31 // pred_check
          %p301 = pneg %p43
        $region34: #{tpu_custom_call.1} parent=31 // pred_check_branch
          %303 = sbr.rel (%p301) target = $region36
        $region35: #{tpu_custom_call.1} parent=31 // pred_region
          %p304 = scmp.lt.s32.totalorder %s23, 3
          %s305 = scalar_select %p304, %s23, 3
          %s306 = smul.addr %s305, 8
          %s307 = scalar_lea.vmem %s0, %s306
        $region36: #{tpu_custom_call.1} parent=31 // pred_fallthru
          _
        // Predicated region
        $region37: #{tpu_custom_call.1} parent=31 // pred_check
          %p308 = pneg %p153
        $region38: #{tpu_custom_call.1} parent=31 // pred_check_branch
          %310 = sbr.rel (%p308) target = $region40
        $region39: #{tpu_custom_call.1} parent=31 // pred_region
          %p311 = scmp.lt.s32.totalorder %s23, 3
          %s312 = scalar_select %p311, %s23, 3
          %s313 = scalar_lea.vmem %s5, %s312
        $region40: #{tpu_custom_call.1} parent=31 // pred_fallthru
          _
        // Predicated region
        $region41: #{tpu_custom_call.1} parent=31 // pred_check
          %p314 = pneg %p179
        $region42: #{tpu_custom_call.1} parent=31 // pred_check_branch
          %316 = sbr.rel (%p314) target = $region44
        $region43: #{tpu_custom_call.1} parent=31 // pred_region
          %p317 = scmp.lt.s32.totalorder %s23, 3
          %s318 = scalar_select %p317, %s23, 3
          %s319 = smul.addr %s318, 8
          %s320 = scalar_lea.vmem %s6, %s319
        $region44: #{tpu_custom_call.1} parent=31 // pred_fallthru
          _
      $region32: #{tpu_custom_call.1} parent=5 // pred_fallthru
        _
      %p321 = scmp.le.s32.totalorder 1, %s23
      %p322 = scmp.lt.s32.totalorder %s23, 5
      %p323 = pnand %p321, %p322
      %p324 = pneg %p323
      // Predicated region
      $region45: #{tpu_custom_call.1} parent=5 // pred_check
        _
      $region46: #{tpu_custom_call.1} parent=5 // pred_check_branch
        %326 = sbr.rel (%p323) target = $region48
      $region47: #{tpu_custom_call.1} parent=5 // pred_region
        %s327 = ssub.s32 %s23, 1
        // Predicated region
        $region49: #{tpu_custom_call.1} parent=47 // pred_check
          %p328 = pneg %p70
        $region50: #{tpu_custom_call.1} parent=47 // pred_check_branch
          %330 = sbr.rel (%p328) target = $region52
        $region51: #{tpu_custom_call.1} parent=47 // pred_region
          %332 = dma.done [#allocation4], 768
        $region52: #{tpu_custom_call.1} parent=47 // pred_fallthru
          _
        // Predicated region
        $region53: #{tpu_custom_call.1} parent=47 // pred_check
          %p333 = pneg %p91
        $region54: #{tpu_custom_call.1} parent=47 // pred_check_branch
          %335 = sbr.rel (%p333) target = $region56
        $region55: #{tpu_custom_call.1} parent=47 // pred_region
          %337 = dma.done [#allocation7], 48
        $region56: #{tpu_custom_call.1} parent=47 // pred_fallthru
          _
        // Predicated region
        $region57: #{tpu_custom_call.1} parent=47 // pred_check
          %p338 = pneg %p112
        $region58: #{tpu_custom_call.1} parent=47 // pred_check_branch
          %340 = sbr.rel (%p338) target = $region60
        $region59: #{tpu_custom_call.1} parent=47 // pred_region
          %342 = dma.done [#allocation7], 256
        $region60: #{tpu_custom_call.1} parent=47 // pred_fallthru
          _
        %p343 = scmp.lt.s32.totalorder %s28, 3
        %s344 = scalar_select %p343, %s28, 3
        %s345 = smul.addr %s344, 8
        %s346 = scalar_lea.vmem %s0, %s345
        %p347 = pneg %p49
        %p348 = pneg %p46
        %p349 = pneg %p70
        %p350 = pneg %p67
        %p351 = pneg %p91
        %p352 = pneg %p88
        %p353 = pneg %p112
        %p354 = pneg %p109
        %p355 = pneg %p133
        %p356 = pneg %p130
        %p357 = scmp.lt.s32.totalorder %s28, 3
        %s358 = scalar_select %p357, %s28, 3
        %s359 = scalar_lea.vmem %s5, %s358
        %p360 = pneg %p159
        %p361 = pneg %p156
        %p362 = scmp.lt.s32.totalorder %s28, 3
        %s363 = scalar_select %p362, %s28, 3
        %s364 = smul.addr %s363, 8
        %s365 = scalar_lea.vmem %s6, %s364
        %p366 = pneg %p185
        %p367 = pneg %p182
        %p368 = pneg %p211
        %p369 = pneg %p208
        %s370 = sand.u32 %s198, 1
        %s371 = scalar_lea.sflag [#allocation5], %s370
        %s372 = sand.u32 %s198, 1
        %s373 = smul.addr %s372, 8
        %s374 = scalar_lea.vmem [#allocation9], %s373
        %p375 = pneg %p237
        %p376 = pneg %p234
        %s377 = sand.u32 %s224, 1
        %s378 = scalar_lea.sflag [#allocation11], %s377
        %s379 = sand.u32 %s224, 1
        %s380 = smul.addr %s379, 4
        %s381 = scalar_lea.vmem [#allocation10], %s380
        %p382 = scmp.lt.s32.totalorder %s28, 3
        %s383 = scalar_select %p382, %s28, 3
        %s384 = smul.addr %s383, 8
        %s385 = scalar_lea.vmem %s0, %s384
        %p386 = scmp.lt.s32.totalorder %s28, 3
        %s387 = scalar_select %p386, %s28, 3
        %s388 = scalar_lea.vmem %s5, %s387
        %p389 = scmp.lt.s32.totalorder %s28, 3
        %s390 = scalar_select %p389, %s28, 3
        %s391 = smul.addr %s390, 8
        %s392 = scalar_lea.vmem %s6, %s391
        %v394 = vld [vmem:[%s385] sm:$0xff]
        %v395 = vpack.c.bf16 %v394, %v394
        %v396 = vld [vmem:[#allocation3] sm:$0xf]
        %v397 = vld [vmem:[#allocation3 + $0x4] sm:$0xf]
        %v398 = vld [vmem:[#allocation3 + $0x8] sm:$0xf]
        %v399 = vld [vmem:[#allocation3 + $0xc] sm:$0xf]
        %v400 = vld [vmem:[#allocation6] sm:$0x1]
        %v402 = vperm.slane %v400, 0
        %v408 = vunpack.c.l.b16 %v396
        %v409 = vunpack.c.l.b16 %v397
        %v410 = vunpack.c.l.b16 %v398
        %v411 = vunpack.c.l.b16 %v399
        %v412 = vpack.c.b16 %v409, %v408
        %v413 = vpack.c.b16 %v411, %v410
        %vm416 = vcmask 261120
        %v418 = vsel %vm416, %v395, 0
        %420 = vmatpush.bf16.msra.mxu0 0
        %421 = vmatpush.bf16.msra.mxu0 0
        %422 = vmatpush.bf16.msra.mxu0 0
        %423 = vmatpush.bf16.msra.mxu0 0
        %424 = vmatpush.bf16.msra.mxu0 0
        %425 = vmatpush.bf16.msra.mxu0 0
        %426 = vmatpush.bf16.msra.mxu0 %v413
        %427 = vmatpush.bf16.msra.mxu0 %v412
        %428 = vmatmul.bf16.gmra.mxu0 %v418
        %v429 = vpop.f32.mrf.mxu0
        %v430 = vadd.f32 %v402, %v429
        %v431 = vpop.f32.mrf.mxu0
        %432 = vdwg.mxu0
        %v433 = vpack.c.bf16 %v430, %v430
        %vm434 = vcmask 257024
        %435 = vst.msk [vmem:[#allocation2] sm:$0xf] %vm434, %v433
        %s436 = scalar_lea.vmem [#allocation3], 16
        %v437 = vld [vmem:[%s436] sm:$0xf]
        %v438 = vld [vmem:[%s436 + $0x4] sm:$0xf]
        %v439 = vld [vmem:[%s436 + $0x8] sm:$0xf]
        %v440 = vld [vmem:[%s436 + $0xc] sm:$0xf]
        %s441 = scalar_lea.vmem [#allocation6], 1
        %v442 = vld [vmem:[%s441] sm:$0x1]
        %v444 = vperm.slane %v442, 0
        %v450 = vunpack.c.l.b16 %v437
        %v451 = vunpack.c.l.b16 %v438
        %v452 = vunpack.c.l.b16 %v439
        %v453 = vunpack.c.l.b16 %v440
        %v454 = vpack.c.b16 %v451, %v450
        %v455 = vpack.c.b16 %v453, %v452
        %458 = vmatpush.bf16.msra.mxu0 0
        %459 = vmatpush.bf16.msra.mxu0 0
        %460 = vmatpush.bf16.msra.mxu0 0
        %461 = vmatpush.bf16.msra.mxu0 0
        %462 = vmatpush.bf16.msra.mxu0 0
        %463 = vmatpush.bf16.msra.mxu0 0
        %464 = vmatpush.bf16.msra.mxu0 %v455
        %465 = vmatpush.bf16.msra.mxu0 %v454
        %466 = vmatmul.bf16.gmra.mxu0 %v418
        %v467 = vpop.f32.mrf.mxu0
        %v468 = vadd.f32 %v444, %v467
        %v469 = vpop.f32.mrf.mxu0
        %470 = vdwg.mxu0
        %v471 = vpack.c.bf16 %v468, %v468
        %s472 = scalar_lea.vmem [#allocation2], 4
        %473 = vst.msk [vmem:[%s472] sm:$0xf] %vm434, %v471
        %s474 = scalar_lea.vmem [#allocation3], 32
        %v475 = vld [vmem:[%s474] sm:$0xf]
        %v476 = vld [vmem:[%s474 + $0x4] sm:$0xf]
        %v477 = vld [vmem:[%s474 + $0x8] sm:$0xf]
        %v478 = vld [vmem:[%s474 + $0xc] sm:$0xf]
        %s479 = scalar_lea.vmem [#allocation6], 2
        %v480 = vld [vmem:[%s479] sm:$0x1]
        %v482 = vperm.slane %v480, 0
        %v488 = vunpack.c.l.b16 %v475
        %v489 = vunpack.c.l.b16 %v476
        %v490 = vunpack.c.l.b16 %v477
        %v491 = vunpack.c.l.b16 %v478
        %v492 = vpack.c.b16 %v489, %v488
        %v493 = vpack.c.b16 %v491, %v490
        %496 = vmatpush.bf16.msra.mxu0 0
        %497 = vmatpush.bf16.msra.mxu0 0
        %498 = vmatpush.bf16.msra.mxu0 0
        %499 = vmatpush.bf16.msra.mxu0 0
        %500 = vmatpush.bf16.msra.mxu0 0
        %501 = vmatpush.bf16.msra.mxu0 0
        %502 = vmatpush.bf16.msra.mxu0 %v493
        %503 = vmatpush.bf16.msra.mxu0 %v492
        %504 = vmatmul.bf16.gmra.mxu0 %v418
        %v505 = vpop.f32.mrf.mxu0
        %v506 = vadd.f32 %v482, %v505
        %v507 = vpop.f32.mrf.mxu0
        %508 = vdwg.mxu0
        %v509 = vpack.c.bf16 %v506, %v506
        %s510 = scalar_lea.vmem [#allocation2], 8
        %511 = vst.msk [vmem:[%s510] sm:$0xf] %vm434, %v509
        %v512 = vld [vmem:[#allocation2] sm:$0xf]
        %v513 = vld [vmem:[%s472] sm:$0xf]
        %v514 = vld [vmem:[%s510] sm:$0xf]
        %v515 = vld [vmem:[%s388] sm:$0x1]
        %v517 = vperm.slane %v515, 0
        %v520 = vsel %vm416, %v512, 0
        %v523 = vsel %vm416, %v513, 0
        %525 = vmatpush.bf16.xpose.msra.mxu0 0
        %526 = vmatpush.bf16.xpose.msra.mxu0 0
        %527 = vmatpush.bf16.xpose.msra.mxu0 0
        %528 = vmatpush.bf16.xpose.msra.mxu0 0
        %529 = vmatpush.bf16.xpose.msra.mxu0 0
        %530 = vmatpush.bf16.xpose.msra.mxu0 0
        %531 = vmatpush.bf16.xpose.msra.mxu0 0
        %532 = vmatpush.bf16.xpose.msra.mxu0 %v523
        %533 = vmatmul.bf16.gmra.mxu0 %v520
        %v534 = vpop.f32.mrf.mxu0
        %v535 = vadd.f32 %v517, %v534
        %v536 = vpop.f32.mrf.mxu0
        %537 = vdwg.mxu0
        %vm538 = vcmask 64512
        %v539 = vsel %vm538, %v535, -inf
        %540 = vmax.xlane.f32.xlu0 %v539
        %v541 = vpop.xlane.xlu0 %540
        %v542 = vsub.f32 %v535, %v541
        %v543 = vmul.f32 %v542, 1.442695
        %v544 = vpow.pop %v543
        %v545 = vsel %vm538, %v544, 0.0
        %546 = vadd.xlane.f32.xlu0 %v545
        %v547 = vpop.xlane.xlu0 %546
        %v548 = vrcp.pop %v547
        %v549 = vmul.f32 %v547, %v548
        %v550 = vsub.f32 1.0, %v549
        %v551 = vmul.f32 %v548, %v550
        %v552 = vadd.f32 %v548, %v551
        %vm553 = vweird.f32 %v547
        %vm554 = vweird.f32 %v548
        %vm555 = vmor %vm553, %vm554
        %v556 = vsel %vm555, %v548, %v552
        %v557 = vand.u32 2147483647, %v547
        %vm558 = vcmp.eq.f32.partialorder %v557, 8.507059e+37
        %v559 = vand.u32 %v547, 2147483648
        %v560 = vor.u32 1.1754944e-38, %v559
        %v561 = vsel %vm558, %v560, %v556
        %v562 = vmul.f32 %v544, %v561
        %v563 = vpack.c.bf16 %v562, %v562
        %vm564 = vcmask 60416
        %565 = vst.msk [vmem:[%s381] sm:$0xf] %vm564, %v563
        %v566 = vrcp.pop %v547
        %v567 = vmul.f32 %v544, %v566
        %v568 = vpack.c.bf16 %v567, %v567
        %v570 = vsel %vm538, %v568, 0
        %vm572 = vcmask 1043456
        %v574 = vsel %vm572, %v514, 0
        %576 = vmatpush.bf16.msra.mxu0 0
        %577 = vmatpush.bf16.msra.mxu0 0
        %578 = vmatpush.bf16.msra.mxu0 0
        %579 = vmatpush.bf16.msra.mxu0 0
        %580 = vmatpush.bf16.msra.mxu0 0
        %581 = vmatpush.bf16.msra.mxu0 0
        %582 = vmatpush.bf16.msra.mxu0 0
        %583 = vmatpush.bf16.msra.mxu0 %v574
        %584 = vmatmul.bf16.gmra.mxu0 %v570
        %v585 = vpop.f32.mrf.mxu0
        %v586 = vadd.f32 0.0, %v585
        %v587 = vpop.f32.mrf.mxu0
        %588 = vdwg.mxu0
        %v589 = vpack.c.bf16 %v586, %v586
        %v590 = vld [vmem:[#allocation8] sm:$0xf]
        %v591 = vld [vmem:[#allocation8 + $0x4] sm:$0xf]
        %v592 = vld [vmem:[#allocation8 + $0x8] sm:$0xf]
        %v593 = vld [vmem:[#allocation8 + $0xc] sm:$0xf]
        %v594 = vld [vmem:[%s4] sm:$0x1]
        %v596 = vperm.slane %v594, 0
        %v602 = vunpack.c.l.b16 %v590
        %v603 = vunpack.c.l.b16 %v591
        %v604 = vunpack.c.l.b16 %v592
        %v605 = vunpack.c.l.b16 %v593
        %v606 = vpack.c.b16 %v603, %v602
        %v607 = vpack.c.b16 %v605, %v604
        %v611 = vsel %vm416, %v589, 0
        %613 = vmatpush.bf16.msra.mxu0 0
        %614 = vmatpush.bf16.msra.mxu0 0
        %615 = vmatpush.bf16.msra.mxu0 0
        %616 = vmatpush.bf16.msra.mxu0 0
        %617 = vmatpush.bf16.msra.mxu0 0
        %618 = vmatpush.bf16.msra.mxu0 0
        %619 = vmatpush.bf16.msra.mxu0 %v607
        %620 = vmatpush.bf16.msra.mxu0 %v606
        %621 = vmatmul.bf16.gmra.mxu0 %v611
        %v622 = vpop.f32.mrf.mxu0
        %v623 = vadd.f32 %v596, %v622
        %v624 = vpop.f32.mrf.mxu0
        %625 = vdwg.mxu0
        %v626 = vld [vmem:[%s392] sm:$0xff]
        %628 = vset.pattern.permute.xlu0 0
        %629 = vperm.xlu0 %628, %v626
        %v630 = vpop.permute.xlu0 %629
        %v632 = vmul.f32 %v623, %v630
        %633 = vst.msk [vmem:[%s374] sm:$0xff] %vm416, %v632
        %s634 = sand.u32 %s198, 1
        %s635 = scalar_lea.sflag [#allocation5], %s634
        %s636 = sand.u32 %s198, 1
        %s637 = smul.addr %s636, 8
        %s638 = scalar_lea.vmem [#allocation9], %s637
        %s639 = sand.u32 %s224, 1
        %s640 = scalar_lea.sflag [#allocation11], %s639
        %s641 = sand.u32 %s224, 1
        %s642 = smul.addr %s641, 4
        %s643 = scalar_lea.vmem [#allocation10], %s642
        // Predicated region
        $region61: #{tpu_custom_call.1} parent=47 // pred_check
          %p644 = pneg %p208
        $region62: #{tpu_custom_call.1} parent=47 // pred_check_branch
          %646 = sbr.rel (%p644) target = $region64
        $region63: #{tpu_custom_call.1} parent=47 // pred_region
          %648 = vsyncadd %s635, 0
          %s649 = smul.addr %s28, 8
          %s650 = scalar_lea.hbm %s7, %s649
          %s652 = sshll.u32 %s638, 4
          %s653 = int_to_ptr.vmem [resolvable:$true] %s652
          %s654 = sshll.u32 %s650, 4
          %s655 = int_to_ptr.hbm [resolvable:$true] %s654
          %657 = dma.vmem_to_hbm [thread:$0]  %s653, 128, %s655, %s635
        $region64: #{tpu_custom_call.1} parent=47 // pred_fallthru
          _
        // Predicated region
        $region65: #{tpu_custom_call.1} parent=47 // pred_check
          %p658 = pneg %p234
        $region66: #{tpu_custom_call.1} parent=47 // pred_check_branch
          %660 = sbr.rel (%p658) target = $region68
        $region67: #{tpu_custom_call.1} parent=47 // pred_region
          %662 = vsyncadd %s640, 0
          %s663 = smul.addr %s28, 4
          %s664 = scalar_lea.hbm %s8, %s663
          %s666 = sshll.u32 %s643, 4
          %s667 = int_to_ptr.vmem [resolvable:$true] %s666
          %s668 = sshll.u32 %s664, 4
          %s669 = int_to_ptr.hbm [resolvable:$true] %s668
          %671 = dma.vmem_to_hbm [thread:$0]  %s667, 64, %s669, %s640
        $region68: #{tpu_custom_call.1} parent=47 // pred_fallthru
          _
      $region48: #{tpu_custom_call.1} parent=5 // pred_fallthru
        _
      %p672 = scmp.le.s32.totalorder 2, %s23
      // Predicated region
      $region69: #{tpu_custom_call.1} parent=5 // pred_check
        %p673 = pneg %p672
      $region70: #{tpu_custom_call.1} parent=5 // pred_check_branch
        %675 = sbr.rel (%p673) target = $region72
      $region71: #{tpu_custom_call.1} parent=5 // pred_region
        %s676 = ssub.s32 %s23, 2
        // Predicated region
        $region73: #{tpu_custom_call.1} parent=71 // pred_check
          %p677 = pneg %p214
        $region74: #{tpu_custom_call.1} parent=71 // pred_check_branch
          %679 = sbr.rel (%p677) target = $region76
        $region75: #{tpu_custom_call.1} parent=71 // pred_region
          %s680 = sand.u32 %s199, 1
          %s681 = scalar_lea.sflag [#allocation5], %s680
          %s682 = sand.u32 %s199, 1
          %s683 = smul.addr %s682, 8
          %s684 = scalar_lea.vmem [#allocation9], %s683
          %686 = dma.done %s681, 128
        $region76: #{tpu_custom_call.1} parent=71 // pred_fallthru
          _
        // Predicated region
        $region77: #{tpu_custom_call.1} parent=71 // pred_check
          %p687 = pneg %p240
        $region78: #{tpu_custom_call.1} parent=71 // pred_check_branch
          %689 = sbr.rel (%p687) target = $region80
        $region79: #{tpu_custom_call.1} parent=71 // pred_region
          %s690 = sand.u32 %s225, 1
          %s691 = scalar_lea.sflag [#allocation11], %s690
          %s692 = sand.u32 %s225, 1
          %s693 = smul.addr %s692, 4
          %s694 = scalar_lea.vmem [#allocation10], %s693
          %696 = dma.done %s691, 64
        $region80: #{tpu_custom_call.1} parent=71 // pred_fallthru
          _
      $region72: #{tpu_custom_call.1} parent=5 // pred_fallthru
        _
    $region6: #{tpu_custom_call.1} parent=1 // loop_footer
      %s27 = sadd.s32 1, %s23
    $region7: #{tpu_custom_call.1} parent=1 // loop_footer_branch
      %22 = sbr.rel target = $region3
    $region8: #{tpu_custom_call.1} parent=1 // loop_exit
      _
    %697 = vsyncpa [#allocation4], 1
    %s698 = scalar_lea.sflag [#allocation4], 1
    %699 = vsyncpa %s698, 1
    %700 = vsyncpa [#allocation7], 1
    %701 = vsyncpa [#allocation5], 1
    %s702 = scalar_lea.sflag [#allocation5], 1
    %703 = vsyncpa %s702, 1
    %704 = vsyncpa [#allocation11], 1
    %s705 = scalar_lea.sflag [#allocation11], 1
    %706 = vsyncpa %s705, 1

</llo_original>
